<compile_context>
chip_gen: v6e
topology: v6e:2x2x1
jax: 0.10.0
libtpu: 0.0.40
codegen_flags: <defaults>
</compile_context>

<pallas_src>
import functools

import jax
import jax.numpy as jnp
from jax.experimental import pallas as pl
from jax.experimental.pallas import tpu as pltpu


def _splatter_kernel(bias_smem, x_ref, toe_ref, out_ref, xh,
                     *, fh, h, w, ho, wo, pad_top):
    # bias_smem: (1, 1) scalar in SMEM.
    # x_ref    : (1, H, W)   one (n, c) input plane.
    # toe_ref  : (FH, W, Wo) banded Toeplitz stack (same block every grid step
    #            -> fetched once, stays VMEM-resident).
    # out_ref  : (1, Ho, Wo) matching output plane.
    # xh       : (pad_top + H + FH - 1, W) VMEM scratch: H-padded frame.

    # Zero ONLY the halo row strips (review #4); the interior is fully
    # overwritten right below.  pad_top is a multiple of 8, so the interior
    # store starts on a sublane-tile boundary (aligned store, review #2).
    if pad_top > 0:
        xh[0:pad_top, :] = jnp.zeros((pad_top, w), jnp.float32)
    if fh > 1:
        xh[pad_top + h:pad_top + h + fh - 1, :] = jnp.zeros((fh - 1, w), jnp.float32)
    xh[pad_top:pad_top + h, :] = x_ref[0]

    # out[yo, xo] = bias + sum_i  xh[base + i + yo, :] @ toe[i][:, xo]
    # toe[i] is the (W, Wo) banded Toeplitz of (flipped) filter row i, so all
    # MACs run on the MXU, there are no lane-direction shifts at all, and only
    # `fh` sublane-offset reads remain (XLU has plenty of slack here).
    base = pad_top - (fh - 1)
    acc = jnp.full((ho, wo), bias_smem[0, 0], jnp.float32)
    for i in range(fh):                            # FH is small -> fully unrolled
        acc = acc + jnp.dot(
            xh[base + i:base + i + ho, :], toe_ref[i],
            preferred_element_type=jnp.float32,
            precision=jax.lax.Precision.HIGHEST)
    out_ref[0] = acc


def splatter_forward(x, filt, bias):
    """x: (N, C, H, W); filt: (FH, FW); bias: (1, 1).  Returns (N, C, Ho, Wo) f32."""
    n, c, h, w = x.shape
    fh, fw = filt.shape
    ho, wo = h + fh - 1, w + fw - 1
    nc = n * c
    pad_top = ((fh - 1 + 7) // 8) * 8      # halo rows, rounded up to a sublane tile
    hp = pad_top + h + fh - 1

    # NCHW consumed directly: merging (N, C) is a free, layout-preserving
    # reshape -- no relayout transpose on either side (review #1).
    xf = x.astype(jnp.float32).reshape(nc, h, w)
    ff = filt.astype(jnp.float32)

    # Banded Toeplitz stack for the W-direction splat (review #9), already in
    # the order the correlation-form kernel consumes:
    #   toe[i] = S[fh-1-i],  S[r][x, xo] = filt[r, xo - x]  (0 <= xo - x < fw)
    eyes = [jnp.eye(w, wo, k=j, dtype=jnp.float32) for j in range(fw)]
    toe = jnp.stack([sum(ff[fh - 1 - i, j] * eyes[j] for j in range(fw))
                     for i in range(fh)])                          # (FH, W, Wo)

    # Per-generation VMEM sizing (review #5, #7).
    try:
        vmem_cap = int(pltpu.get_tpu_info().vmem_capacity_bytes)
    except Exception:
        vmem_cap = 64 * 1024 * 1024        # conservative fallback (v7x-sized)
    budget = (vmem_cap * 3) // 4           # ~48 MiB on v7x, ~96 MiB on v5e/v6e

    per_step = 4 * (2 * h * w              # input plane (double-buffered)
                    + 2 * ho * wo          # output plane (double-buffered)
                    + hp * w               # H-padded scratch
                    + fh * w * wo)         # resident Toeplitz stack
    if per_step + (2 << 20) > budget:
        # TODO(synk): add an H-row-tiled variant ((fh-1)-row halo via manual
        # DMA) for single planes too large for VMEM (matters on v7x's 64 MiB
        # only for ~>1500^2 images); not needed at the sizes exercised here.
        raise ValueError(
            f"splatter: per-plane working set {per_step} B exceeds VMEM budget {budget} B")
    vmem_limit = int(min(max(per_step + (4 << 20), 32 << 20), budget))

    kernel = functools.partial(_splatter_kernel, fh=fh, h=h, w=w, ho=ho, wo=wo,
                               pad_top=pad_top)

    out = pl.pallas_call(
        kernel,
        out_shape=jax.ShapeDtypeStruct((nc, ho, wo), jnp.float32),
        grid=(nc,),                        # >= 2 steps whenever N*C >= 2 (review #6)
        in_specs=[
            pl.BlockSpec(memory_space=pltpu.MemorySpace.SMEM),      # bias (1, 1)
            pl.BlockSpec((1, h, w), lambda p: (p, 0, 0)),           # one input plane
            pl.BlockSpec((fh, w, wo), lambda p: (0, 0, 0)),         # Toeplitz, resident
        ],
        out_specs=pl.BlockSpec((1, ho, wo), lambda p: (p, 0, 0)),
        scratch_shapes=[pltpu.VMEM((hp, w), jnp.float32)],
        compiler_params=pltpu.CompilerParams(
            dimension_semantics=("parallel",),
            vmem_limit_bytes=vmem_limit,
        ),
    )(bias.astype(jnp.float32), xf, toe)

    return out.reshape(n, c, ho, wo)       # free reshape back to (N, C, Ho, Wo)


def _splatter_reference(x, filt, bias):
    """Pure-JAX reference: scatter/splat form of the same op."""
    n, c, h, w = x.shape
    fh, fw = filt.shape
    out = jnp.zeros((n, c, h + fh - 1, w + fw - 1), jnp.float32)
    for i in range(fh):
        for j in range(fw):
            out = out.at[:, :, i:i + h, j:j + w].add(x.astype(jnp.float32) * filt[i, j])
    return out + bias[0, 0]


if __name__ == "__main__":
    key = jax.random.PRNGKey(0)
    k1, k2, k3 = jax.random.split(key, 3)

    # Module's own example: input (5, 1, 8, 8); Splatter(filter_width=3, filter_height=3)
    x = jax.random.uniform(k1, (5, 1, 8, 8), dtype=jnp.float32)
    filt = jax.random.normal(k2, (3, 3), dtype=jnp.float32)   # Parameter(randn(fw, fh))
    bias = jax.random.normal(k3, (1, 1), dtype=jnp.float32)   # Parameter(randn(1, 1))

    fwd = jax.jit(splatter_forward)
    out = jax.block_until_ready(fwd(x, filt, bias))
    ref = _splatter_reference(x, filt, bias)
    assert out.shape == (5, 1, 10, 10)
    err = float(jnp.max(jnp.abs(out - ref)))
    assert err < 1e-2, err        # MXU f32 at HIGHEST precision: typically ~1e-6

    # A slightly fatter case: batch=2, channels=4, 16x16 spatial, 5x5 filter.
    k4, k5, k6 = jax.random.split(k3, 3)
    x2 = jax.random.uniform(k4, (2, 4, 16, 16), dtype=jnp.float32)
    f2 = jax.random.normal(k5, (5, 5), dtype=jnp.float32)
    b2 = jax.random.normal(k6, (1, 1), dtype=jnp.float32)
    out2 = jax.block_until_ready(jax.jit(splatter_forward)(x2, f2, b2))
    ref2 = _splatter_reference(x2, f2, b2)
    assert out2.shape == (2, 4, 20, 20)
    err2 = float(jnp.max(jnp.abs(out2 - ref2)))
    assert err2 < 1e-2, err2

    print("KERNEL_OK")
</pallas_src>

<mosaic_0001>
module attributes {stable_mosaic.version = 11 : i64} {
  func.func @_splatter_kernel(%arg0: i32, %arg1: memref<1x1xf32, #tpu.memory_space<smem>>, %arg2: memref<1x8x8xf32, #tpu.memory_space<vmem>>, %arg3: memref<3x8x10xf32, #tpu.memory_space<vmem>>, %arg4: memref<1x10x10xf32, #tpu.memory_space<vmem>>, %arg5: memref<18x8xf32, #tpu.memory_space<vmem>>) attributes {dimension_semantics = [#tpu.dimension_semantics<parallel>], iteration_bounds = array<i64: 5>, scalar_prefetch = 0 : i64, scratch_operands = 1 : i64, tpu.core_type = #tpu.core_type<tc>, window_params = [{transform_indices = @transform_0, window_bounds = array<i64: 1, 1>}, {transform_indices = @transform_1, window_bounds = array<i64: 1, 8, 8>}, {pipeline_mode = #tpu.pipeline_mode<synchronous>, transform_indices = @transform_2, window_bounds = array<i64: 3, 8, 10>}, {transform_indices = @transform_3, window_bounds = array<i64: 1, 10, 10>}]} {
    %cst = arith.constant 0.000000e+00 : f32
    %0 = vector.broadcast %cst : f32 to vector<8x8xf32>
    %c0 = arith.constant 0 : index
    %c0_0 = arith.constant 0 : index
    %1 = vector.load %arg5[%c0, %c0_0] : memref<18x8xf32, #tpu.memory_space<vmem>>, vector<8x8xf32>
    tpu.vector_store %arg5[%c0, %c0_0], %0 {strides = array<i32>} : memref<18x8xf32, #tpu.memory_space<vmem>>, vector<8x8xf32>,
    %cst_1 = arith.constant 0.000000e+00 : f32
    %2 = vector.broadcast %cst_1 : f32 to vector<2x8xf32>
    %c16 = arith.constant 16 : index
    %c0_2 = arith.constant 0 : index
    %3 = vector.load %arg5[%c16, %c0_2] : memref<18x8xf32, #tpu.memory_space<vmem>>, vector<2x8xf32>
    tpu.vector_store %arg5[%c16, %c0_2], %2 {strides = array<i32>} : memref<18x8xf32, #tpu.memory_space<vmem>>, vector<2x8xf32>,
    %c0_3 = arith.constant 0 : index
    %c0_4 = arith.constant 0 : index
    %c0_5 = arith.constant 0 : index
    %4 = vector.load %arg2[%c0_3, %c0_4, %c0_5] : memref<1x8x8xf32, #tpu.memory_space<vmem>>, vector<1x8x8xf32>
    %5 = vector.shape_cast %4 : vector<1x8x8xf32> to vector<8x8xf32>
    %c8 = arith.constant 8 : index
    %c0_6 = arith.constant 0 : index
    %6 = vector.load %arg5[%c8, %c0_6] : memref<18x8xf32, #tpu.memory_space<vmem>>, vector<8x8xf32>
    tpu.vector_store %arg5[%c8, %c0_6], %5 {strides = array<i32>} : memref<18x8xf32, #tpu.memory_space<vmem>>, vector<8x8xf32>,
    %c0_7 = arith.constant 0 : index
    %c0_8 = arith.constant 0 : index
    %7 = memref.load %arg1[%c0_7, %c0_8] : memref<1x1xf32, #tpu.memory_space<smem>>
    %8 = vector.broadcast %7 : f32 to vector<10x10xf32>
    %c6 = arith.constant 6 : index
    %c0_9 = arith.constant 0 : index
    %9 = vector.load %arg5[%c6, %c0_9] : memref<18x8xf32, #tpu.memory_space<vmem>>, vector<10x8xf32>
    %c0_10 = arith.constant 0 : index
    %c0_11 = arith.constant 0 : index
    %c0_12 = arith.constant 0 : index
    %10 = vector.load %arg3[%c0_10, %c0_11, %c0_12] : memref<3x8x10xf32, #tpu.memory_space<vmem>>, vector<1x8x10xf32>
    %11 = vector.shape_cast %10 : vector<1x8x10xf32> to vector<8x10xf32>
    %cst_13 = arith.constant dense<0.000000e+00> : vector<10x10xf32>
    %12 = tpu.matmul %9, %11, %cst_13 {dimension_numbers = #tpu.dot_dimension_numbers<[1], [0], [0], [1], [0, 0, 1, 1], [], []>, precision = #tpu.contract_precision<fp32>} : vector<10x8xf32>, vector<8x10xf32>, vector<10x10xf32> -> vector<10x10xf32>
    %13 = arith.addf %8, %12 : vector<10x10xf32>
    %c7 = arith.constant 7 : index
    %c0_14 = arith.constant 0 : index
    %14 = vector.load %arg5[%c7, %c0_14] : memref<18x8xf32, #tpu.memory_space<vmem>>, vector<10x8xf32>
    %c1 = arith.constant 1 : index
    %c0_15 = arith.constant 0 : index
    %c0_16 = arith.constant 0 : index
    %15 = vector.load %arg3[%c1, %c0_15, %c0_16] : memref<3x8x10xf32, #tpu.memory_space<vmem>>, vector<1x8x10xf32>
    %16 = vector.shape_cast %15 : vector<1x8x10xf32> to vector<8x10xf32>
    %cst_17 = arith.constant dense<0.000000e+00> : vector<10x10xf32>
    %17 = tpu.matmul %14, %16, %cst_17 {dimension_numbers = #tpu.dot_dimension_numbers<[1], [0], [0], [1], [0, 0, 1, 1], [], []>, precision = #tpu.contract_precision<fp32>} : vector<10x8xf32>, vector<8x10xf32>, vector<10x10xf32> -> vector<10x10xf32>
    %18 = arith.addf %13, %17 : vector<10x10xf32>
    %c8_18 = arith.constant 8 : index
    %c0_19 = arith.constant 0 : index
    %19 = vector.load %arg5[%c8_18, %c0_19] : memref<18x8xf32, #tpu.memory_space<vmem>>, vector<10x8xf32>
    %c2 = arith.constant 2 : index
    %c0_20 = arith.constant 0 : index
    %c0_21 = arith.constant 0 : index
    %20 = vector.load %arg3[%c2, %c0_20, %c0_21] : memref<3x8x10xf32, #tpu.memory_space<vmem>>, vector<1x8x10xf32>
    %21 = vector.shape_cast %20 : vector<1x8x10xf32> to vector<8x10xf32>
    %cst_22 = arith.constant dense<0.000000e+00> : vector<10x10xf32>
    %22 = tpu.matmul %19, %21, %cst_22 {dimension_numbers = #tpu.dot_dimension_numbers<[1], [0], [0], [1], [0, 0, 1, 1], [], []>, precision = #tpu.contract_precision<fp32>} : vector<10x8xf32>, vector<8x10xf32>, vector<10x10xf32> -> vector<10x10xf32>
    %23 = arith.addf %18, %22 : vector<10x10xf32>
    %c0_23 = arith.constant 0 : index
    %c0_24 = arith.constant 0 : index
    %c0_25 = arith.constant 0 : index
    %24 = vector.load %arg4[%c0_23, %c0_24, %c0_25] : memref<1x10x10xf32, #tpu.memory_space<vmem>>, vector<1x10x10xf32>
    %25 = vector.shape_cast %24 : vector<1x10x10xf32> to vector<10x10xf32>
    %26 = vector.shape_cast %23 : vector<10x10xf32> to vector<1x10x10xf32>
    tpu.vector_store %arg4[%c0_23, %c0_24, %c0_25], %26 {strides = array<i32>} : memref<1x10x10xf32, #tpu.memory_space<vmem>>, vector<1x10x10xf32>,
    return
  }
  func.func @transform_0(%arg0: i32) -> (i32, i32) {
    %c0_i32 = arith.constant 0 : i32
    %c0_i32_0 = arith.constant 0 : i32
    %c0_i32_1 = arith.constant 0 : i32
    return %c0_i32, %c0_i32_0 : i32, i32
  }
  func.func @transform_1(%arg0: i32) -> (i32, i32, i32) {
    %c0_i32 = arith.constant 0 : i32
    %c0_i32_0 = arith.constant 0 : i32
    %c0_i32_1 = arith.constant 0 : i32
    return %arg0, %c0_i32, %c0_i32_0 : i32, i32, i32
  }
  func.func @transform_2(%arg0: i32) -> (i32, i32, i32) {
    %c0_i32 = arith.constant 0 : i32
    %c0_i32_0 = arith.constant 0 : i32
    %c0_i32_1 = arith.constant 0 : i32
    %c0_i32_2 = arith.constant 0 : i32
    return %c0_i32, %c0_i32_0, %c0_i32_1 : i32, i32, i32
  }
  func.func @transform_3(%arg0: i32) -> (i32, i32, i32) {
    %c0_i32 = arith.constant 0 : i32
    %c0_i32_0 = arith.constant 0 : i32
    %c0_i32_1 = arith.constant 0 : i32
    return %arg0, %c0_i32, %c0_i32_0 : i32, i32, i32
  }
}

</mosaic_0001>

<llo_original>
// kernel: splatter_forward.1
$region0: #{splatter_forward.1}
  #allocation0 [shape = 'u32[]', space=smem, size = 0x4, offset = 0x4, fixed_abs, tag = 'smem constant byte address 0x4 - core index']
  #allocation1 [shape = 'u32[144,128]{1,0:T(1,128)}', space=vmem, size = 0x12000, scoped, tag = 'internal scratch']
  #allocation2 [shape = 'f32[18,8]{1,0:T(8,128)}', space=vmem, size = 0x3000, scoped, tag = 'scratch operand']
  #allocation3 [shape = 'f32[1,1]{1,0:T(1,128)S(6)}', space=smem, size = 0x200, scoped, tag = 'scoped memory for splatter_forward.1']
  %s0 = inlined_call_operand.<no memory space> [shape: f32[1,1], index: 0, kind: input, shape index: {}]
  %s1 = inlined_call_operand.vmem [shape: f32[5,8,8], index: 1, kind: input, shape index: {}]
  %s2 = inlined_call_operand.vmem [shape: f32[3,8,10], index: 2, kind: input, shape index: {}]
  %s3 = inlined_call_operand.vmem [shape: f32[5,10,10], index: 3, kind: output, shape index: {}]
  %s4 = sld [smem:[#allocation0]]
  $region45: #{splatter_forward.1} parent=0
    _
  %s6 = ssub.s32 1, %s4
  %s7 = scalar_select 0, %s6, %s4
  %8 = sst [smem:[#allocation3]] %s0
  loop: start=0, step=1, limit=7
  $region2: #{splatter_forward.1} parent=0 // loop_pre_header
    _
  $region3: #{splatter_forward.1} parent=0 // loop_header
    %s10 = sphi 0, %s14
    %p11 = scmp.ge.s32.totalorder %s10, 7
    %s18 = sphi 0, %s18
    %s20 = sphi 0, %s18
    %s21 = sphi 0, %s20
    %s35 = sphi 0, %s21
    %s41 = sphi 0, %s43
    %s44 = sphi 0, %s41
    %s45 = sphi 0, %s44
    %s61 = sphi 0, %s45
    %s65 = sphi 0, %s65
    %s67 = sphi 0, %s65
    %s68 = sphi 0, %s67
    %s82 = sphi 0, %s68
    %s88 = sphi 0, %s90
    %s91 = sphi 0, %s88
    %s92 = sphi 0, %s91
    %s108 = sphi 0, %s92
  $region4: #{splatter_forward.1} parent=0 // loop_header_branch
    %13 = sbr.rel (%p11) target = $region8
  $region5: #{splatter_forward.1} parent=0 // loop_body
    %s15 = ssub.s32 %s10, 1
    %s16 = ssub.s32 %s10, 2
    %s17 = sadd.s32 %s10, 1
    %s19 = sadd.s32 %s18, 1
    %p22 = scmp.eq.s32.totalorder %s10, 4
    %p23 = scmp.ne.s32.totalorder %s18, %s20
    %p24 = scmp.eq.s32.totalorder %s10, 0
    %p25 = por %p23, %p24
    %p26 = scmp.ne.s32.totalorder %s18, %s20
    %p27 = scmp.eq.s32.totalorder %s15, 4
    %p28 = por %p26, %p27
    %p29 = scmp.ne.s32.totalorder %s20, %s21
    %p30 = scmp.eq.s32.totalorder %s15, 0
    %p31 = por %p29, %p30
    %p32 = scmp.ne.s32.totalorder %s20, %s21
    %p33 = scmp.eq.s32.totalorder %s16, 4
    %p34 = por %p32, %p33
    %p36 = scmp.ne.s32.totalorder %s21, %s35
    %p37 = scmp.eq.s32.totalorder %s16, 0
    %p38 = por %p36, %p37
    %s39 = ssub.s32 %s10, %s17
    %p40 = scmp.eq.s32.totalorder %s39, 0
    %s42 = sadd.s32 %s41, 1
    %s43 = scalar_select %p40, %s41, %s42
    %p46 = pneg %p40
    %p47 = scmp.eq.s32.totalorder %s10, 4
    %p48 = por %p46, %p47
    %p49 = scmp.ne.s32.totalorder %s41, %s44
    %p50 = scmp.eq.s32.totalorder %s10, 0
    %p51 = por %p49, %p50
    %p52 = scmp.ne.s32.totalorder %s41, %s44
    %p53 = scmp.eq.s32.totalorder %s15, 4
    %p54 = por %p52, %p53
    %p55 = scmp.ne.s32.totalorder %s44, %s45
    %p56 = scmp.eq.s32.totalorder %s15, 0
    %p57 = por %p55, %p56
    %p58 = scmp.ne.s32.totalorder %s44, %s45
    %p59 = scmp.eq.s32.totalorder %s16, 4
    %p60 = por %p58, %p59
    %p62 = scmp.ne.s32.totalorder %s45, %s61
    %p63 = scmp.eq.s32.totalorder %s16, 0
    %p64 = por %p62, %p63
    %s66 = sadd.s32 %s65, 1
    %p69 = scmp.eq.s32.totalorder %s10, 4
    %p70 = scmp.ne.s32.totalorder %s65, %s67
    %p71 = scmp.eq.s32.totalorder %s10, 0
    %p72 = por %p70, %p71
    %p73 = scmp.ne.s32.totalorder %s65, %s67
    %p74 = scmp.eq.s32.totalorder %s15, 4
    %p75 = por %p73, %p74
    %p76 = scmp.ne.s32.totalorder %s67, %s68
    %p77 = scmp.eq.s32.totalorder %s15, 0
    %p78 = por %p76, %p77
    %p79 = scmp.ne.s32.totalorder %s67, %s68
    %p80 = scmp.eq.s32.totalorder %s16, 4
    %p81 = por %p79, %p80
    %p83 = scmp.ne.s32.totalorder %s68, %s82
    %p84 = scmp.eq.s32.totalorder %s16, 0
    %p85 = por %p83, %p84
    %s86 = ssub.s32 %s10, %s17
    %p87 = scmp.eq.s32.totalorder %s86, 0
    %s89 = sadd.s32 %s88, 1
    %s90 = scalar_select %p87, %s88, %s89
    %p93 = pneg %p87
    %p94 = scmp.eq.s32.totalorder %s10, 4
    %p95 = por %p93, %p94
    %p96 = scmp.ne.s32.totalorder %s88, %s91
    %p97 = scmp.eq.s32.totalorder %s10, 0
    %p98 = por %p96, %p97
    %p99 = scmp.ne.s32.totalorder %s88, %s91
    %p100 = scmp.eq.s32.totalorder %s15, 4
    %p101 = por %p99, %p100
    %p102 = scmp.ne.s32.totalorder %s91, %s92
    %p103 = scmp.eq.s32.totalorder %s15, 0
    %p104 = por %p102, %p103
    %p105 = scmp.ne.s32.totalorder %s91, %s92
    %p106 = scmp.eq.s32.totalorder %s16, 4
    %p107 = por %p105, %p106
    %p109 = scmp.ne.s32.totalorder %s92, %s108
    %p110 = scmp.eq.s32.totalorder %s16, 0
    %p111 = por %p109, %p110
    %p112 = scmp.le.s32.totalorder 1, %s10
    %p113 = scmp.lt.s32.totalorder %s10, 6
    %p114 = pnand %p112, %p113
    %p115 = pneg %p114
    // Predicated region
    $region9: #{splatter_forward.1} parent=5 // pred_check
      _
    $region10: #{splatter_forward.1} parent=5 // pred_check_branch
      %117 = sbr.rel (%p114) target = $region12
    $region11: #{splatter_forward.1} parent=5 // pred_region
      %s118 = ssub.s32 %s10, 1
      // Predicated region
      $region13: #{splatter_forward.1} parent=11 // pred_check
        %p119 = pneg %p31
      $region14: #{splatter_forward.1} parent=11 // pred_check_branch
        %121 = sbr.rel (%p119) target = $region16
      $region15: #{splatter_forward.1} parent=11 // pred_region
        _
      $region16: #{splatter_forward.1} parent=11 // pred_fallthru
        _
      // Predicated region
      $region17: #{splatter_forward.1} parent=11 // pred_check
        %p122 = pneg %p78
      $region18: #{splatter_forward.1} parent=11 // pred_check_branch
        %124 = sbr.rel (%p122) target = $region20
      $region19: #{splatter_forward.1} parent=11 // pred_region
        _
      $region20: #{splatter_forward.1} parent=11 // pred_fallthru
        _
    $region12: #{splatter_forward.1} parent=5 // pred_fallthru
      _
    %p125 = scmp.lt.s32.totalorder %s10, 5
    // Predicated region
    $region21: #{splatter_forward.1} parent=5 // pred_check
      %p126 = pneg %p125
    $region22: #{splatter_forward.1} parent=5 // pred_check_branch
      %128 = sbr.rel (%p126) target = $region24
    $region23: #{splatter_forward.1} parent=5 // pred_region
      // Predicated region
      $region25: #{splatter_forward.1} parent=23 // pred_check
        %p129 = pneg %p51
      $region26: #{splatter_forward.1} parent=23 // pred_check_branch
        %131 = sbr.rel (%p129) target = $region28
      $region27: #{splatter_forward.1} parent=23 // pred_region
        %p132 = scmp.lt.s32.totalorder %s10, 4
        %s133 = scalar_select %p132, %s10, 4
        %s134 = smul.addr %s133, 8
        %s135 = scalar_lea.vmem %s1, %s134
      $region28: #{splatter_forward.1} parent=23 // pred_fallthru
        _
    $region24: #{splatter_forward.1} parent=5 // pred_fallthru
      _
    %p136 = scmp.le.s32.totalorder 1, %s10
    %p137 = scmp.lt.s32.totalorder %s10, 6
    %p138 = pnand %p136, %p137
    %p139 = pneg %p138
    // Predicated region
    $region29: #{splatter_forward.1} parent=5 // pred_check
      _
    $region30: #{splatter_forward.1} parent=5 // pred_check_branch
      %141 = sbr.rel (%p138) target = $region32
    $region31: #{splatter_forward.1} parent=5 // pred_region
      %s142 = ssub.s32 %s10, 1
      %p143 = pneg %p31
      %p144 = pneg %p28
      %p145 = scmp.lt.s32.totalorder %s15, 4
      %s146 = scalar_select %p145, %s15, 4
      %s147 = smul.addr %s146, 8
      %s148 = scalar_lea.vmem %s1, %s147
      %p149 = pneg %p57
      %p150 = pneg %p54
      %p151 = pneg %p78
      %p152 = pneg %p75
      %p153 = pneg %p104
      %p154 = pneg %p101
      %p155 = scmp.lt.s32.totalorder %s15, 4
      %s156 = scalar_select %p155, %s15, 4
      %s157 = smul.addr %s156, 2
      %s158 = smul.addr %s157, 8
      %s159 = scalar_lea.vmem %s3, %s158
      %p160 = scmp.lt.s32.totalorder %s15, 4
      %s161 = scalar_select %p160, %s15, 4
      %s162 = smul.addr %s161, 8
      %s163 = scalar_lea.vmem %s1, %s162
      %p164 = scmp.lt.s32.totalorder %s15, 4
      %s165 = scalar_select %p164, %s15, 4
      %s166 = smul.addr %s165, 2
      %s167 = smul.addr %s166, 8
      %s168 = scalar_lea.vmem %s3, %s167
      %vm169 = vcmask 64512
      %170 = vst.msk [vmem:[#allocation2] sm:$0xff] %vm169, 0.0
      %vm171 = vcmask 58368
      %172 = vst.msk [vmem:[#allocation2 + $0x10] sm:$0x3] %vm171, 0.0
      %v173 = vld [vmem:[%s163] sm:$0xff]
      %174 = vst.msk [vmem:[#allocation2 + $0x8] sm:$0xff] %vm169, %v173
      %s175 = sld [smem:[#allocation3]]
      %v176 = vstv %s175
      %v177 = vld [vmem:[#allocation2 + $0x6] sm:$0xff]
      %v178 = vld [vmem:[#allocation2 + $0xe] sm:$0x3]
      %v179 = vld [vmem:[%s2] sm:$0xff]
      %v181 = vsel %vm169, %v177, 0
      %v184 = vsel %vm169, %v178, 0
      %186 = vmatprep.subr.mxu0 0.0
      %187 = vmatpush1.msra.mxu0 0.0
      %188 = vmatprep.subr.mxu0 0.0
      %189 = vmatpush1.msra.mxu0 0.0
      %190 = vmatprep.subr.mxu0 0.0
      %191 = vmatpush1.msra.mxu0 0.0
      %192 = vmatprep.subr.mxu0 0.0
      %193 = vmatpush1.msra.mxu0 0.0
      %194 = vmatprep.subr.mxu0 0.0
      %195 = vmatpush1.msra.mxu0 0.0
      %196 = vmatprep.subr.mxu0 0.0
      %197 = vmatpush1.msra.mxu0 0.0
      %198 = vmatprep.subr.mxu0 0.0
      %199 = vmatpush1.msra.mxu0 0.0
      %200 = vmatprep.subr.mxu0 0.0
      %201 = vmatpush1.msra.mxu0 0.0
      %202 = vmatprep.subr.mxu0 0.0
      %203 = vmatpush1.msra.mxu0 0.0
      %204 = vmatprep.subr.mxu0 0.0
      %205 = vmatpush1.msra.mxu0 0.0
      %206 = vmatprep.subr.mxu0 0.0
      %207 = vmatpush1.msra.mxu0 0.0
      %208 = vmatprep.subr.mxu0 0.0
      %209 = vmatpush1.msra.mxu0 0.0
      %210 = vmatprep.subr.mxu0 0.0
      %211 = vmatpush1.msra.mxu0 0.0
      %212 = vmatprep.subr.mxu0 0.0
      %213 = vmatpush1.msra.mxu0 0.0
      %214 = vmatprep.subr.mxu0 0.0
      %215 = vmatpush1.msra.mxu0 0.0
      %216 = vmatprep.subr.mxu0 0.0
      %v217 = vand.u32 %v179, 4294901760
      %218 = vmatpush1.msra.mxu0 %v217
      %219 = vmatprep.subr.mxu0 0.0
      %220 = vmatpush2.msra.mxu0 0.0
      %221 = vmatprep.subr.mxu0 0.0
      %222 = vmatpush2.msra.mxu0 0.0
      %223 = vmatprep.subr.mxu0 0.0
      %224 = vmatpush2.msra.mxu0 0.0
      %225 = vmatprep.subr.mxu0 0.0
      %226 = vmatpush2.msra.mxu0 0.0
      %227 = vmatprep.subr.mxu0 0.0
      %228 = vmatpush2.msra.mxu0 0.0
      %229 = vmatprep.subr.mxu0 0.0
      %230 = vmatpush2.msra.mxu0 0.0
      %231 = vmatprep.subr.mxu0 0.0
      %232 = vmatpush2.msra.mxu0 0.0
      %233 = vmatprep.subr.mxu0 0.0
      %234 = vmatpush2.msra.mxu0 0.0
      %235 = vmatprep.subr.mxu0 0.0
      %236 = vmatpush2.msra.mxu0 0.0
      %237 = vmatprep.subr.mxu0 0.0
      %238 = vmatpush2.msra.mxu0 0.0
      %239 = vmatprep.subr.mxu0 0.0
      %240 = vmatpush2.msra.mxu0 0.0
      %241 = vmatprep.subr.mxu0 0.0
      %242 = vmatpush2.msra.mxu0 0.0
      %243 = vmatprep.subr.mxu0 0.0
      %244 = vmatpush2.msra.mxu0 0.0
      %245 = vmatprep.subr.mxu0 0.0
      %246 = vmatpush2.msra.mxu0 0.0
      %247 = vmatprep.subr.mxu0 0.0
      %248 = vmatpush2.msra.mxu0 0.0
      %249 = vmatprep.subr.mxu0 0.0
      %250 = vmatpush2.msra.mxu0 0.0
      %251 = vmatprep.mubr.f32.mxu0 0.0
      %v252 = vand.u32 %v181, 4294901760
      %v253 = vsub.f32 %v181, %v252
      %v254 = vand.u32 %v253, 4294901760
      %v255 = vsub.f32 %v253, %v254
      %v256 = vand.u32 %v255, 4294901760
      %257 = vmatmul.mubr.f32.gmra.mxu0 %v256
      %v258 = vpop.f32.mrf.mxu0
      %v259 = vadd.f32 0.0, %v258
      %v260 = vpop.f32.mrf.mxu0
      %261 = vmatprep.mubr.f32.mxu0 0.0
      %v262 = vand.u32 %v184, 4294901760
      %v263 = vsub.f32 %v184, %v262
      %v264 = vand.u32 %v263, 4294901760
      %v265 = vsub.f32 %v263, %v264
      %v266 = vand.u32 %v265, 4294901760
      %267 = vmatmul.mubr.f32.gmra.mxu0 %v266
      %v268 = vpop.f32.mrf.mxu0
      %v269 = vadd.f32 0.0, %v268
      %v270 = vpop.f32.mrf.mxu0
      %271 = vdwg.mxu0
      %272 = vmatprep.subr.mxu0 0.0
      %273 = vmatpush1.msra.mxu0 0.0
      %274 = vmatprep.subr.mxu0 0.0
      %275 = vmatpush1.msra.mxu0 0.0
      %276 = vmatprep.subr.mxu0 0.0
      %277 = vmatpush1.msra.mxu0 0.0
      %278 = vmatprep.subr.mxu0 0.0
      %279 = vmatpush1.msra.mxu0 0.0
      %280 = vmatprep.subr.mxu0 0.0
      %281 = vmatpush1.msra.mxu0 0.0
      %282 = vmatprep.subr.mxu0 0.0
      %283 = vmatpush1.msra.mxu0 0.0
      %284 = vmatprep.subr.mxu0 0.0
      %285 = vmatpush1.msra.mxu0 0.0
      %286 = vmatprep.subr.mxu0 0.0
      %287 = vmatpush1.msra.mxu0 0.0
      %288 = vmatprep.subr.mxu0 0.0
      %289 = vmatpush1.msra.mxu0 0.0
      %290 = vmatprep.subr.mxu0 0.0
      %291 = vmatpush1.msra.mxu0 0.0
      %292 = vmatprep.subr.mxu0 0.0
      %293 = vmatpush1.msra.mxu0 0.0
      %294 = vmatprep.subr.mxu0 0.0
      %295 = vmatpush1.msra.mxu0 0.0
      %296 = vmatprep.subr.mxu0 0.0
      %297 = vmatpush1.msra.mxu0 0.0
      %298 = vmatprep.subr.mxu0 0.0
      %299 = vmatpush1.msra.mxu0 0.0
      %300 = vmatprep.subr.mxu0 0.0
      %301 = vmatpush1.msra.mxu0 0.0
      %302 = vmatprep.subr.mxu0 0.0
      %v303 = vand.u32 %v179, 4294901760
      %v304 = vsub.f32 %v179, %v303
      %v305 = vand.u32 %v304, 4294901760
      %v306 = vsub.f32 %v304, %v305
      %v307 = vand.u32 %v306, 4294901760
      %308 = vmatpush1.msra.mxu0 %v307
      %309 = vmatprep.subr.mxu0 0.0
      %310 = vmatpush2.msra.mxu0 0.0
      %311 = vmatprep.subr.mxu0 0.0
      %312 = vmatpush2.msra.mxu0 0.0
      %313 = vmatprep.subr.mxu0 0.0
      %314 = vmatpush2.msra.mxu0 0.0
      %315 = vmatprep.subr.mxu0 0.0
      %316 = vmatpush2.msra.mxu0 0.0
      %317 = vmatprep.subr.mxu0 0.0
      %318 = vmatpush2.msra.mxu0 0.0
      %319 = vmatprep.subr.mxu0 0.0
      %320 = vmatpush2.msra.mxu0 0.0
      %321 = vmatprep.subr.mxu0 0.0
      %322 = vmatpush2.msra.mxu0 0.0
      %323 = vmatprep.subr.mxu0 0.0
      %324 = vmatpush2.msra.mxu0 0.0
      %325 = vmatprep.subr.mxu0 0.0
      %326 = vmatpush2.msra.mxu0 0.0
      %327 = vmatprep.subr.mxu0 0.0
      %328 = vmatpush2.msra.mxu0 0.0
      %329 = vmatprep.subr.mxu0 0.0
      %330 = vmatpush2.msra.mxu0 0.0
      %331 = vmatprep.subr.mxu0 0.0
      %332 = vmatpush2.msra.mxu0 0.0
      %333 = vmatprep.subr.mxu0 0.0
      %334 = vmatpush2.msra.mxu0 0.0
      %335 = vmatprep.subr.mxu0 0.0
      %336 = vmatpush2.msra.mxu0 0.0
      %337 = vmatprep.subr.mxu0 0.0
      %338 = vmatpush2.msra.mxu0 0.0
      %339 = vmatprep.subr.mxu0 0.0
      %340 = vmatpush2.msra.mxu0 0.0
      %341 = vmatprep.mubr.f32.mxu0 0.0
      %v342 = vand.u32 %v181, 4294901760
      %343 = vmatmul.mubr.f32.gmra.mxu0 %v342
      %v344 = vpop.f32.mrf.mxu0
      %v345 = vadd.f32 %v259, %v344
      %v346 = vpop.f32.mrf.mxu0
      %347 = vmatprep.mubr.f32.mxu0 0.0
      %v348 = vand.u32 %v184, 4294901760
      %349 = vmatmul.mubr.f32.gmra.mxu0 %v348
      %v350 = vpop.f32.mrf.mxu0
      %v351 = vadd.f32 %v269, %v350
      %v352 = vpop.f32.mrf.mxu0
      %353 = vdwg.mxu0
      %354 = vmatprep.subr.mxu0 0.0
      %355 = vmatpush1.msra.mxu0 0.0
      %356 = vmatprep.subr.mxu0 0.0
      %357 = vmatpush1.msra.mxu0 0.0
      %358 = vmatprep.subr.mxu0 0.0
      %359 = vmatpush1.msra.mxu0 0.0
      %360 = vmatprep.subr.mxu0 0.0
      %361 = vmatpush1.msra.mxu0 0.0
      %362 = vmatprep.subr.mxu0 0.0
      %363 = vmatpush1.msra.mxu0 0.0
      %364 = vmatprep.subr.mxu0 0.0
      %365 = vmatpush1.msra.mxu0 0.0
      %366 = vmatprep.subr.mxu0 0.0
      %367 = vmatpush1.msra.mxu0 0.0
      %368 = vmatprep.subr.mxu0 0.0
      %369 = vmatpush1.msra.mxu0 0.0
      %370 = vmatprep.subr.mxu0 0.0
      %371 = vmatpush1.msra.mxu0 0.0
      %372 = vmatprep.subr.mxu0 0.0
      %373 = vmatpush1.msra.mxu0 0.0
      %374 = vmatprep.subr.mxu0 0.0
      %375 = vmatpush1.msra.mxu0 0.0
      %376 = vmatprep.subr.mxu0 0.0
      %377 = vmatpush1.msra.mxu0 0.0
      %378 = vmatprep.subr.mxu0 0.0
      %379 = vmatpush1.msra.mxu0 0.0
      %380 = vmatprep.subr.mxu0 0.0
      %381 = vmatpush1.msra.mxu0 0.0
      %382 = vmatprep.subr.mxu0 0.0
      %383 = vmatpush1.msra.mxu0 0.0
      %384 = vmatprep.subr.mxu0 0.0
      %v385 = vand.u32 %v179, 4294901760
      %v386 = vsub.f32 %v179, %v385
      %387 = vmatpush1.msra.mxu0 %v386
      %388 = vmatprep.subr.mxu0 0.0
      %389 = vmatpush2.msra.mxu0 0.0
      %390 = vmatprep.subr.mxu0 0.0
      %391 = vmatpush2.msra.mxu0 0.0
      %392 = vmatprep.subr.mxu0 0.0
      %393 = vmatpush2.msra.mxu0 0.0
      %394 = vmatprep.subr.mxu0 0.0
      %395 = vmatpush2.msra.mxu0 0.0
      %396 = vmatprep.subr.mxu0 0.0
      %397 = vmatpush2.msra.mxu0 0.0
      %398 = vmatprep.subr.mxu0 0.0
      %399 = vmatpush2.msra.mxu0 0.0
      %400 = vmatprep.subr.mxu0 0.0
      %401 = vmatpush2.msra.mxu0 0.0
      %402 = vmatprep.subr.mxu0 0.0
      %403 = vmatpush2.msra.mxu0 0.0
      %404 = vmatprep.subr.mxu0 0.0
      %405 = vmatpush2.msra.mxu0 0.0
      %406 = vmatprep.subr.mxu0 0.0
      %407 = vmatpush2.msra.mxu0 0.0
      %408 = vmatprep.subr.mxu0 0.0
      %409 = vmatpush2.msra.mxu0 0.0
      %410 = vmatprep.subr.mxu0 0.0
      %411 = vmatpush2.msra.mxu0 0.0
      %412 = vmatprep.subr.mxu0 0.0
      %413 = vmatpush2.msra.mxu0 0.0
      %414 = vmatprep.subr.mxu0 0.0
      %415 = vmatpush2.msra.mxu0 0.0
      %416 = vmatprep.subr.mxu0 0.0
      %417 = vmatpush2.msra.mxu0 0.0
      %418 = vmatprep.subr.mxu0 0.0
      %419 = vmatpush2.msra.mxu0 0.0
      %420 = vmatprep.mubr.f32.mxu0 0.0
      %v421 = vand.u32 %v181, 4294901760
      %v422 = vsub.f32 %v181, %v421
      %423 = vmatmul.mubr.f32.gmra.mxu0 %v422
      %v424 = vpop.f32.mrf.mxu0
      %v425 = vadd.f32 %v345, %v424
      %v426 = vpop.f32.mrf.mxu0
      %427 = vmatprep.mubr.f32.mxu0 0.0
      %v428 = vand.u32 %v184, 4294901760
      %v429 = vsub.f32 %v184, %v428
      %430 = vmatmul.mubr.f32.gmra.mxu0 %v429
      %v431 = vpop.f32.mrf.mxu0
      %v432 = vadd.f32 %v351, %v431
      %v433 = vpop.f32.mrf.mxu0
      %434 = vdwg.mxu0
      %435 = vmatprep.subr.mxu0 0.0
      %436 = vmatpush1.msra.mxu0 0.0
      %437 = vmatprep.subr.mxu0 0.0
      %438 = vmatpush1.msra.mxu0 0.0
      %439 = vmatprep.subr.mxu0 0.0
      %440 = vmatpush1.msra.mxu0 0.0
      %441 = vmatprep.subr.mxu0 0.0
      %442 = vmatpush1.msra.mxu0 0.0
      %443 = vmatprep.subr.mxu0 0.0
      %444 = vmatpush1.msra.mxu0 0.0
      %445 = vmatprep.subr.mxu0 0.0
      %446 = vmatpush1.msra.mxu0 0.0
      %447 = vmatprep.subr.mxu0 0.0
      %448 = vmatpush1.msra.mxu0 0.0
      %449 = vmatprep.subr.mxu0 0.0
      %450 = vmatpush1.msra.mxu0 0.0
      %451 = vmatprep.subr.mxu0 0.0
      %452 = vmatpush1.msra.mxu0 0.0
      %453 = vmatprep.subr.mxu0 0.0
      %454 = vmatpush1.msra.mxu0 0.0
      %455 = vmatprep.subr.mxu0 0.0
      %456 = vmatpush1.msra.mxu0 0.0
      %457 = vmatprep.subr.mxu0 0.0
      %458 = vmatpush1.msra.mxu0 0.0
      %459 = vmatprep.subr.mxu0 0.0
      %460 = vmatpush1.msra.mxu0 0.0
      %461 = vmatprep.subr.mxu0 0.0
      %462 = vmatpush1.msra.mxu0 0.0
      %463 = vmatprep.subr.mxu0 0.0
      %464 = vmatpush1.msra.mxu0 0.0
      %465 = vmatprep.subr.mxu0 0.0
      %v466 = vand.u32 %v179, 4294901760
      %467 = vmatpush1.msra.mxu0 %v466
      %468 = vmatprep.subr.mxu0 0.0
      %469 = vmatpush2.msra.mxu0 0.0
      %470 = vmatprep.subr.mxu0 0.0
      %471 = vmatpush2.msra.mxu0 0.0
      %472 = vmatprep.subr.mxu0 0.0
      %473 = vmatpush2.msra.mxu0 0.0
      %474 = vmatprep.subr.mxu0 0.0
      %475 = vmatpush2.msra.mxu0 0.0
      %476 = vmatprep.subr.mxu0 0.0
      %477 = vmatpush2.msra.mxu0 0.0
      %478 = vmatprep.subr.mxu0 0.0
      %479 = vmatpush2.msra.mxu0 0.0
      %480 = vmatprep.subr.mxu0 0.0
      %481 = vmatpush2.msra.mxu0 0.0
      %482 = vmatprep.subr.mxu0 0.0
      %483 = vmatpush2.msra.mxu0 0.0
      %484 = vmatprep.subr.mxu0 0.0
      %485 = vmatpush2.msra.mxu0 0.0
      %486 = vmatprep.subr.mxu0 0.0
      %487 = vmatpush2.msra.mxu0 0.0
      %488 = vmatprep.subr.mxu0 0.0
      %489 = vmatpush2.msra.mxu0 0.0
      %490 = vmatprep.subr.mxu0 0.0
      %491 = vmatpush2.msra.mxu0 0.0
      %492 = vmatprep.subr.mxu0 0.0
      %493 = vmatpush2.msra.mxu0 0.0
      %494 = vmatprep.subr.mxu0 0.0
      %495 = vmatpush2.msra.mxu0 0.0
      %496 = vmatprep.subr.mxu0 0.0
      %497 = vmatpush2.msra.mxu0 0.0
      %498 = vmatprep.subr.mxu0 0.0
      %499 = vmatpush2.msra.mxu0 0.0
      %500 = vmatprep.mubr.f32.mxu0 0.0
      %v501 = vand.u32 %v181, 4294901760
      %v502 = vsub.f32 %v181, %v501
      %v503 = vand.u32 %v502, 4294901760
      %504 = vmatmul.mubr.f32.gmra.mxu0 %v503
      %v505 = vpop.f32.mrf.mxu0
      %v506 = vadd.f32 %v425, %v505
      %v507 = vpop.f32.mrf.mxu0
      %508 = vmatprep.mubr.f32.mxu0 0.0
      %v509 = vand.u32 %v184, 4294901760
      %v510 = vsub.f32 %v184, %v509
      %v511 = vand.u32 %v510, 4294901760
      %512 = vmatmul.mubr.f32.gmra.mxu0 %v511
      %v513 = vpop.f32.mrf.mxu0
      %v514 = vadd.f32 %v432, %v513
      %v515 = vpop.f32.mrf.mxu0
      %516 = vdwg.mxu0
      %517 = vmatprep.subr.mxu0 0.0
      %518 = vmatpush1.msra.mxu0 0.0
      %519 = vmatprep.subr.mxu0 0.0
      %520 = vmatpush1.msra.mxu0 0.0
      %521 = vmatprep.subr.mxu0 0.0
      %522 = vmatpush1.msra.mxu0 0.0
      %523 = vmatprep.subr.mxu0 0.0
      %524 = vmatpush1.msra.mxu0 0.0
      %525 = vmatprep.subr.mxu0 0.0
      %526 = vmatpush1.msra.mxu0 0.0
      %527 = vmatprep.subr.mxu0 0.0
      %528 = vmatpush1.msra.mxu0 0.0
      %529 = vmatprep.subr.mxu0 0.0
      %530 = vmatpush1.msra.mxu0 0.0
      %531 = vmatprep.subr.mxu0 0.0
      %532 = vmatpush1.msra.mxu0 0.0
      %533 = vmatprep.subr.mxu0 0.0
      %534 = vmatpush1.msra.mxu0 0.0
      %535 = vmatprep.subr.mxu0 0.0
      %536 = vmatpush1.msra.mxu0 0.0
      %537 = vmatprep.subr.mxu0 0.0
      %538 = vmatpush1.msra.mxu0 0.0
      %539 = vmatprep.subr.mxu0 0.0
      %540 = vmatpush1.msra.mxu0 0.0
      %541 = vmatprep.subr.mxu0 0.0
      %542 = vmatpush1.msra.mxu0 0.0
      %543 = vmatprep.subr.mxu0 0.0
      %544 = vmatpush1.msra.mxu0 0.0
      %545 = vmatprep.subr.mxu0 0.0
      %546 = vmatpush1.msra.mxu0 0.0
      %547 = vmatprep.subr.mxu0 0.0
      %v548 = vand.u32 %v179, 4294901760
      %v549 = vsub.f32 %v179, %v548
      %v550 = vand.u32 %v549, 4294901760
      %551 = vmatpush1.msra.mxu0 %v550
      %552 = vmatprep.subr.mxu0 0.0
      %553 = vmatpush2.msra.mxu0 0.0
      %554 = vmatprep.subr.mxu0 0.0
      %555 = vmatpush2.msra.mxu0 0.0
      %556 = vmatprep.subr.mxu0 0.0
      %557 = vmatpush2.msra.mxu0 0.0
      %558 = vmatprep.subr.mxu0 0.0
      %559 = vmatpush2.msra.mxu0 0.0
      %560 = vmatprep.subr.mxu0 0.0
      %561 = vmatpush2.msra.mxu0 0.0
      %562 = vmatprep.subr.mxu0 0.0
      %563 = vmatpush2.msra.mxu0 0.0
      %564 = vmatprep.subr.mxu0 0.0
      %565 = vmatpush2.msra.mxu0 0.0
      %566 = vmatprep.subr.mxu0 0.0
      %567 = vmatpush2.msra.mxu0 0.0
      %568 = vmatprep.subr.mxu0 0.0
      %569 = vmatpush2.msra.mxu0 0.0
      %570 = vmatprep.subr.mxu0 0.0
      %571 = vmatpush2.msra.mxu0 0.0
      %572 = vmatprep.subr.mxu0 0.0
      %573 = vmatpush2.msra.mxu0 0.0
      %574 = vmatprep.subr.mxu0 0.0
      %575 = vmatpush2.msra.mxu0 0.0
      %576 = vmatprep.subr.mxu0 0.0
      %577 = vmatpush2.msra.mxu0 0.0
      %578 = vmatprep.subr.mxu0 0.0
      %579 = vmatpush2.msra.mxu0 0.0
      %580 = vmatprep.subr.mxu0 0.0
      %581 = vmatpush2.msra.mxu0 0.0
      %582 = vmatprep.subr.mxu0 0.0
      %583 = vmatpush2.msra.mxu0 0.0
      %584 = vmatprep.mubr.f32.mxu0 0.0
      %v585 = vand.u32 %v181, 4294901760
      %586 = vmatmul.mubr.f32.gmra.mxu0 %v585
      %v587 = vpop.f32.mrf.mxu0
      %v588 = vadd.f32 %v506, %v587
      %v589 = vpop.f32.mrf.mxu0
      %590 = vmatprep.mubr.f32.mxu0 0.0
      %v591 = vand.u32 %v184, 4294901760
      %592 = vmatmul.mubr.f32.gmra.mxu0 %v591
      %v593 = vpop.f32.mrf.mxu0
      %v594 = vadd.f32 %v514, %v593
      %v595 = vpop.f32.mrf.mxu0
      %596 = vdwg.mxu0
      %597 = vmatprep.subr.mxu0 0.0
      %598 = vmatpush1.msra.mxu0 0.0
      %599 = vmatprep.subr.mxu0 0.0
      %600 = vmatpush1.msra.mxu0 0.0
      %601 = vmatprep.subr.mxu0 0.0
      %602 = vmatpush1.msra.mxu0 0.0
      %603 = vmatprep.subr.mxu0 0.0
      %604 = vmatpush1.msra.mxu0 0.0
      %605 = vmatprep.subr.mxu0 0.0
      %606 = vmatpush1.msra.mxu0 0.0
      %607 = vmatprep.subr.mxu0 0.0
      %608 = vmatpush1.msra.mxu0 0.0
      %609 = vmatprep.subr.mxu0 0.0
      %610 = vmatpush1.msra.mxu0 0.0
      %611 = vmatprep.subr.mxu0 0.0
      %612 = vmatpush1.msra.mxu0 0.0
      %613 = vmatprep.subr.mxu0 0.0
      %614 = vmatpush1.msra.mxu0 0.0
      %615 = vmatprep.subr.mxu0 0.0
      %616 = vmatpush1.msra.mxu0 0.0
      %617 = vmatprep.subr.mxu0 0.0
      %618 = vmatpush1.msra.mxu0 0.0
      %619 = vmatprep.subr.mxu0 0.0
      %620 = vmatpush1.msra.mxu0 0.0
      %621 = vmatprep.subr.mxu0 0.0
      %622 = vmatpush1.msra.mxu0 0.0
      %623 = vmatprep.subr.mxu0 0.0
      %624 = vmatpush1.msra.mxu0 0.0
      %625 = vmatprep.subr.mxu0 0.0
      %626 = vmatpush1.msra.mxu0 0.0
      %627 = vmatprep.subr.mxu0 0.0
      %v628 = vand.u32 %v179, 4294901760
      %629 = vmatpush1.msra.mxu0 %v628
      %630 = vmatprep.subr.mxu0 0.0
      %631 = vmatpush2.msra.mxu0 0.0
      %632 = vmatprep.subr.mxu0 0.0
      %633 = vmatpush2.msra.mxu0 0.0
      %634 = vmatprep.subr.mxu0 0.0
      %635 = vmatpush2.msra.mxu0 0.0
      %636 = vmatprep.subr.mxu0 0.0
      %637 = vmatpush2.msra.mxu0 0.0
      %638 = vmatprep.subr.mxu0 0.0
      %639 = vmatpush2.msra.mxu0 0.0
      %640 = vmatprep.subr.mxu0 0.0
      %641 = vmatpush2.msra.mxu0 0.0
      %642 = vmatprep.subr.mxu0 0.0
      %643 = vmatpush2.msra.mxu0 0.0
      %644 = vmatprep.subr.mxu0 0.0
      %645 = vmatpush2.msra.mxu0 0.0
      %646 = vmatprep.subr.mxu0 0.0
      %647 = vmatpush2.msra.mxu0 0.0
      %648 = vmatprep.subr.mxu0 0.0
      %649 = vmatpush2.msra.mxu0 0.0
      %650 = vmatprep.subr.mxu0 0.0
      %651 = vmatpush2.msra.mxu0 0.0
      %652 = vmatprep.subr.mxu0 0.0
      %653 = vmatpush2.msra.mxu0 0.0
      %654 = vmatprep.subr.mxu0 0.0
      %655 = vmatpush2.msra.mxu0 0.0
      %656 = vmatprep.subr.mxu0 0.0
      %657 = vmatpush2.msra.mxu0 0.0
      %658 = vmatprep.subr.mxu0 0.0
      %659 = vmatpush2.msra.mxu0 0.0
      %660 = vmatprep.subr.mxu0 0.0
      %661 = vmatpush2.msra.mxu0 0.0
      %662 = vmatprep.mubr.f32.mxu0 0.0
      %v663 = vand.u32 %v181, 4294901760
      %664 = vmatmul.mubr.f32.gmra.mxu0 %v663
      %v665 = vpop.f32.mrf.mxu0
      %v666 = vadd.f32 %v588, %v665
      %v667 = vpop.f32.mrf.mxu0
      %668 = vmatprep.mubr.f32.mxu0 0.0
      %v669 = vand.u32 %v184, 4294901760
      %670 = vmatmul.mubr.f32.gmra.mxu0 %v669
      %v671 = vpop.f32.mrf.mxu0
      %v672 = vadd.f32 %v594, %v671
      %v673 = vpop.f32.mrf.mxu0
      %674 = vdwg.mxu0
      %v675 = vadd.f32 %v176, %v666
      %v676 = vadd.f32 %v176, %v672
      %v677 = vld [vmem:[#allocation2 + $0x7] sm:$0xff]
      %v678 = vld [vmem:[#allocation2 + $0xf] sm:$0x3]
      %s679 = scalar_lea.vmem %s2, 8
      %v680 = vld [vmem:[%s679] sm:$0xff]
      %v682 = vsel %vm169, %v677, 0
      %v685 = vsel %vm169, %v678, 0
      %687 = vmatprep.subr.mxu0 0.0
      %688 = vmatpush1.msra.mxu0 0.0
      %689 = vmatprep.subr.mxu0 0.0
      %690 = vmatpush1.msra.mxu0 0.0
      %691 = vmatprep.subr.mxu0 0.0
      %692 = vmatpush1.msra.mxu0 0.0
      %693 = vmatprep.subr.mxu0 0.0
      %694 = vmatpush1.msra.mxu0 0.0
      %695 = vmatprep.subr.mxu0 0.0
      %696 = vmatpush1.msra.mxu0 0.0
      %697 = vmatprep.subr.mxu0 0.0
      %698 = vmatpush1.msra.mxu0 0.0
      %699 = vmatprep.subr.mxu0 0.0
      %700 = vmatpush1.msra.mxu0 0.0
      %701 = vmatprep.subr.mxu0 0.0
      %702 = vmatpush1.msra.mxu0 0.0
      %703 = vmatprep.subr.mxu0 0.0
      %704 = vmatpush1.msra.mxu0 0.0
      %705 = vmatprep.subr.mxu0 0.0
      %706 = vmatpush1.msra.mxu0 0.0
      %707 = vmatprep.subr.mxu0 0.0
      %708 = vmatpush1.msra.mxu0 0.0
      %709 = vmatprep.subr.mxu0 0.0
      %710 = vmatpush1.msra.mxu0 0.0
      %711 = vmatprep.subr.mxu0 0.0
      %712 = vmatpush1.msra.mxu0 0.0
      %713 = vmatprep.subr.mxu0 0.0
      %714 = vmatpush1.msra.mxu0 0.0
      %715 = vmatprep.subr.mxu0 0.0
      %716 = vmatpush1.msra.mxu0 0.0
      %717 = vmatprep.subr.mxu0 0.0
      %v718 = vand.u32 %v680, 4294901760
      %719 = vmatpush1.msra.mxu0 %v718
      %720 = vmatprep.subr.mxu0 0.0
      %721 = vmatpush2.msra.mxu0 0.0
      %722 = vmatprep.subr.mxu0 0.0
      %723 = vmatpush2.msra.mxu0 0.0
      %724 = vmatprep.subr.mxu0 0.0
      %725 = vmatpush2.msra.mxu0 0.0
      %726 = vmatprep.subr.mxu0 0.0
      %727 = vmatpush2.msra.mxu0 0.0
      %728 = vmatprep.subr.mxu0 0.0
      %729 = vmatpush2.msra.mxu0 0.0
      %730 = vmatprep.subr.mxu0 0.0
      %731 = vmatpush2.msra.mxu0 0.0
      %732 = vmatprep.subr.mxu0 0.0
      %733 = vmatpush2.msra.mxu0 0.0
      %734 = vmatprep.subr.mxu0 0.0
      %735 = vmatpush2.msra.mxu0 0.0
      %736 = vmatprep.subr.mxu0 0.0
      %737 = vmatpush2.msra.mxu0 0.0
      %738 = vmatprep.subr.mxu0 0.0
      %739 = vmatpush2.msra.mxu0 0.0
      %740 = vmatprep.subr.mxu0 0.0
      %741 = vmatpush2.msra.mxu0 0.0
      %742 = vmatprep.subr.mxu0 0.0
      %743 = vmatpush2.msra.mxu0 0.0
      %744 = vmatprep.subr.mxu0 0.0
      %745 = vmatpush2.msra.mxu0 0.0
      %746 = vmatprep.subr.mxu0 0.0
      %747 = vmatpush2.msra.mxu0 0.0
      %748 = vmatprep.subr.mxu0 0.0
      %749 = vmatpush2.msra.mxu0 0.0
      %750 = vmatprep.subr.mxu0 0.0
      %751 = vmatpush2.msra.mxu0 0.0
      %752 = vmatprep.mubr.f32.mxu0 0.0
      %v753 = vand.u32 %v682, 4294901760
      %v754 = vsub.f32 %v682, %v753
      %v755 = vand.u32 %v754, 4294901760
      %v756 = vsub.f32 %v754, %v755
      %v757 = vand.u32 %v756, 4294901760
      %758 = vmatmul.mubr.f32.gmra.mxu0 %v757
      %v759 = vpop.f32.mrf.mxu0
      %v760 = vadd.f32 0.0, %v759
      %v761 = vpop.f32.mrf.mxu0
      %762 = vmatprep.mubr.f32.mxu0 0.0
      %v763 = vand.u32 %v685, 4294901760
      %v764 = vsub.f32 %v685, %v763
      %v765 = vand.u32 %v764, 4294901760
      %v766 = vsub.f32 %v764, %v765
      %v767 = vand.u32 %v766, 4294901760
      %768 = vmatmul.mubr.f32.gmra.mxu0 %v767
      %v769 = vpop.f32.mrf.mxu0
      %v770 = vadd.f32 0.0, %v769
      %v771 = vpop.f32.mrf.mxu0
      %772 = vdwg.mxu0
      %773 = vmatprep.subr.mxu0 0.0
      %774 = vmatpush1.msra.mxu0 0.0
      %775 = vmatprep.subr.mxu0 0.0
      %776 = vmatpush1.msra.mxu0 0.0
      %777 = vmatprep.subr.mxu0 0.0
      %778 = vmatpush1.msra.mxu0 0.0
      %779 = vmatprep.subr.mxu0 0.0
      %780 = vmatpush1.msra.mxu0 0.0
      %781 = vmatprep.subr.mxu0 0.0
      %782 = vmatpush1.msra.mxu0 0.0
      %783 = vmatprep.subr.mxu0 0.0
      %784 = vmatpush1.msra.mxu0 0.0
      %785 = vmatprep.subr.mxu0 0.0
      %786 = vmatpush1.msra.mxu0 0.0
      %787 = vmatprep.subr.mxu0 0.0
      %788 = vmatpush1.msra.mxu0 0.0
      %789 = vmatprep.subr.mxu0 0.0
      %790 = vmatpush1.msra.mxu0 0.0
      %791 = vmatprep.subr.mxu0 0.0
      %792 = vmatpush1.msra.mxu0 0.0
      %793 = vmatprep.subr.mxu0 0.0
      %794 = vmatpush1.msra.mxu0 0.0
      %795 = vmatprep.subr.mxu0 0.0
      %796 = vmatpush1.msra.mxu0 0.0
      %797 = vmatprep.subr.mxu0 0.0
      %798 = vmatpush1.msra.mxu0 0.0
      %799 = vmatprep.subr.mxu0 0.0
      %800 = vmatpush1.msra.mxu0 0.0
      %801 = vmatprep.subr.mxu0 0.0
      %802 = vmatpush1.msra.mxu0 0.0
      %803 = vmatprep.subr.mxu0 0.0
      %v804 = vand.u32 %v680, 4294901760
      %v805 = vsub.f32 %v680, %v804
      %v806 = vand.u32 %v805, 4294901760
      %v807 = vsub.f32 %v805, %v806
      %v808 = vand.u32 %v807, 4294901760
      %809 = vmatpush1.msra.mxu0 %v808
      %810 = vmatprep.subr.mxu0 0.0
      %811 = vmatpush2.msra.mxu0 0.0
      %812 = vmatprep.subr.mxu0 0.0
      %813 = vmatpush2.msra.mxu0 0.0
      %814 = vmatprep.subr.mxu0 0.0
      %815 = vmatpush2.msra.mxu0 0.0
      %816 = vmatprep.subr.mxu0 0.0
      %817 = vmatpush2.msra.mxu0 0.0
      %818 = vmatprep.subr.mxu0 0.0
      %819 = vmatpush2.msra.mxu0 0.0
      %820 = vmatprep.subr.mxu0 0.0
      %821 = vmatpush2.msra.mxu0 0.0
      %822 = vmatprep.subr.mxu0 0.0
      %823 = vmatpush2.msra.mxu0 0.0
      %824 = vmatprep.subr.mxu0 0.0
      %825 = vmatpush2.msra.mxu0 0.0
      %826 = vmatprep.subr.mxu0 0.0
      %827 = vmatpush2.msra.mxu0 0.0
      %828 = vmatprep.subr.mxu0 0.0
      %829 = vmatpush2.msra.mxu0 0.0
      %830 = vmatprep.subr.mxu0 0.0
      %831 = vmatpush2.msra.mxu0 0.0
      %832 = vmatprep.subr.mxu0 0.0
      %833 = vmatpush2.msra.mxu0 0.0
      %834 = vmatprep.subr.mxu0 0.0
      %835 = vmatpush2.msra.mxu0 0.0
      %836 = vmatprep.subr.mxu0 0.0
      %837 = vmatpush2.msra.mxu0 0.0
      %838 = vmatprep.subr.mxu0 0.0
      %839 = vmatpush2.msra.mxu0 0.0
      %840 = vmatprep.subr.mxu0 0.0
      %841 = vmatpush2.msra.mxu0 0.0
      %842 = vmatprep.mubr.f32.mxu0 0.0
      %v843 = vand.u32 %v682, 4294901760
      %844 = vmatmul.mubr.f32.gmra.mxu0 %v843
      %v845 = vpop.f32.mrf.mxu0
      %v846 = vadd.f32 %v760, %v845
      %v847 = vpop.f32.mrf.mxu0
      %848 = vmatprep.mubr.f32.mxu0 0.0
      %v849 = vand.u32 %v685, 4294901760
      %850 = vmatmul.mubr.f32.gmra.mxu0 %v849
      %v851 = vpop.f32.mrf.mxu0
      %v852 = vadd.f32 %v770, %v851
      %v853 = vpop.f32.mrf.mxu0
      %854 = vdwg.mxu0
      %855 = vmatprep.subr.mxu0 0.0
      %856 = vmatpush1.msra.mxu0 0.0
      %857 = vmatprep.subr.mxu0 0.0
      %858 = vmatpush1.msra.mxu0 0.0
      %859 = vmatprep.subr.mxu0 0.0
      %860 = vmatpush1.msra.mxu0 0.0
      %861 = vmatprep.subr.mxu0 0.0
      %862 = vmatpush1.msra.mxu0 0.0
      %863 = vmatprep.subr.mxu0 0.0
      %864 = vmatpush1.msra.mxu0 0.0
      %865 = vmatprep.subr.mxu0 0.0
      %866 = vmatpush1.msra.mxu0 0.0
      %867 = vmatprep.subr.mxu0 0.0
      %868 = vmatpush1.msra.mxu0 0.0
      %869 = vmatprep.subr.mxu0 0.0
      %870 = vmatpush1.msra.mxu0 0.0
      %871 = vmatprep.subr.mxu0 0.0
      %872 = vmatpush1.msra.mxu0 0.0
      %873 = vmatprep.subr.mxu0 0.0
      %874 = vmatpush1.msra.mxu0 0.0
      %875 = vmatprep.subr.mxu0 0.0
      %876 = vmatpush1.msra.mxu0 0.0
      %877 = vmatprep.subr.mxu0 0.0
      %878 = vmatpush1.msra.mxu0 0.0
      %879 = vmatprep.subr.mxu0 0.0
      %880 = vmatpush1.msra.mxu0 0.0
      %881 = vmatprep.subr.mxu0 0.0
      %882 = vmatpush1.msra.mxu0 0.0
      %883 = vmatprep.subr.mxu0 0.0
      %884 = vmatpush1.msra.mxu0 0.0
      %885 = vmatprep.subr.mxu0 0.0
      %v886 = vand.u32 %v680, 4294901760
      %v887 = vsub.f32 %v680, %v886
      %888 = vmatpush1.msra.mxu0 %v887
      %889 = vmatprep.subr.mxu0 0.0
      %890 = vmatpush2.msra.mxu0 0.0
      %891 = vmatprep.subr.mxu0 0.0
      %892 = vmatpush2.msra.mxu0 0.0
      %893 = vmatprep.subr.mxu0 0.0
      %894 = vmatpush2.msra.mxu0 0.0
      %895 = vmatprep.subr.mxu0 0.0
      %896 = vmatpush2.msra.mxu0 0.0
      %897 = vmatprep.subr.mxu0 0.0
      %898 = vmatpush2.msra.mxu0 0.0
      %899 = vmatprep.subr.mxu0 0.0
      %900 = vmatpush2.msra.mxu0 0.0
      %901 = vmatprep.subr.mxu0 0.0
      %902 = vmatpush2.msra.mxu0 0.0
      %903 = vmatprep.subr.mxu0 0.0
      %904 = vmatpush2.msra.mxu0 0.0
      %905 = vmatprep.subr.mxu0 0.0
      %906 = vmatpush2.msra.mxu0 0.0
      %907 = vmatprep.subr.mxu0 0.0
      %908 = vmatpush2.msra.mxu0 0.0
      %909 = vmatprep.subr.mxu0 0.0
      %910 = vmatpush2.msra.mxu0 0.0
      %911 = vmatprep.subr.mxu0 0.0
      %912 = vmatpush2.msra.mxu0 0.0
      %913 = vmatprep.subr.mxu0 0.0
      %914 = vmatpush2.msra.mxu0 0.0
      %915 = vmatprep.subr.mxu0 0.0
      %916 = vmatpush2.msra.mxu0 0.0
      %917 = vmatprep.subr.mxu0 0.0
      %918 = vmatpush2.msra.mxu0 0.0
      %919 = vmatprep.subr.mxu0 0.0
      %920 = vmatpush2.msra.mxu0 0.0
      %921 = vmatprep.mubr.f32.mxu0 0.0
      %v922 = vand.u32 %v682, 4294901760
      %v923 = vsub.f32 %v682, %v922
      %924 = vmatmul.mubr.f32.gmra.mxu0 %v923
      %v925 = vpop.f32.mrf.mxu0
      %v926 = vadd.f32 %v846, %v925
      %v927 = vpop.f32.mrf.mxu0
      %928 = vmatprep.mubr.f32.mxu0 0.0
      %v929 = vand.u32 %v685, 4294901760
      %v930 = vsub.f32 %v685, %v929
      %931 = vmatmul.mubr.f32.gmra.mxu0 %v930
      %v932 = vpop.f32.mrf.mxu0
      %v933 = vadd.f32 %v852, %v932
      %v934 = vpop.f32.mrf.mxu0
      %935 = vdwg.mxu0
      %936 = vmatprep.subr.mxu0 0.0
      %937 = vmatpush1.msra.mxu0 0.0
      %938 = vmatprep.subr.mxu0 0.0
      %939 = vmatpush1.msra.mxu0 0.0
      %940 = vmatprep.subr.mxu0 0.0
      %941 = vmatpush1.msra.mxu0 0.0
      %942 = vmatprep.subr.mxu0 0.0
      %943 = vmatpush1.msra.mxu0 0.0
      %944 = vmatprep.subr.mxu0 0.0
      %945 = vmatpush1.msra.mxu0 0.0
      %946 = vmatprep.subr.mxu0 0.0
      %947 = vmatpush1.msra.mxu0 0.0
      %948 = vmatprep.subr.mxu0 0.0
      %949 = vmatpush1.msra.mxu0 0.0
      %950 = vmatprep.subr.mxu0 0.0
      %951 = vmatpush1.msra.mxu0 0.0
      %952 = vmatprep.subr.mxu0 0.0
      %953 = vmatpush1.msra.mxu0 0.0
      %954 = vmatprep.subr.mxu0 0.0
      %955 = vmatpush1.msra.mxu0 0.0
      %956 = vmatprep.subr.mxu0 0.0
      %957 = vmatpush1.msra.mxu0 0.0
      %958 = vmatprep.subr.mxu0 0.0
      %959 = vmatpush1.msra.mxu0 0.0
      %960 = vmatprep.subr.mxu0 0.0
      %961 = vmatpush1.msra.mxu0 0.0
      %962 = vmatprep.subr.mxu0 0.0
      %963 = vmatpush1.msra.mxu0 0.0
      %964 = vmatprep.subr.mxu0 0.0
      %965 = vmatpush1.msra.mxu0 0.0
      %966 = vmatprep.subr.mxu0 0.0
      %v967 = vand.u32 %v680, 4294901760
      %968 = vmatpush1.msra.mxu0 %v967
      %969 = vmatprep.subr.mxu0 0.0
      %970 = vmatpush2.msra.mxu0 0.0
      %971 = vmatprep.subr.mxu0 0.0
      %972 = vmatpush2.msra.mxu0 0.0
      %973 = vmatprep.subr.mxu0 0.0
      %974 = vmatpush2.msra.mxu0 0.0
      %975 = vmatprep.subr.mxu0 0.0
      %976 = vmatpush2.msra.mxu0 0.0
      %977 = vmatprep.subr.mxu0 0.0
      %978 = vmatpush2.msra.mxu0 0.0
      %979 = vmatprep.subr.mxu0 0.0
      %980 = vmatpush2.msra.mxu0 0.0
      %981 = vmatprep.subr.mxu0 0.0
      %982 = vmatpush2.msra.mxu0 0.0
      %983 = vmatprep.subr.mxu0 0.0
      %984 = vmatpush2.msra.mxu0 0.0
      %985 = vmatprep.subr.mxu0 0.0
      %986 = vmatpush2.msra.mxu0 0.0
      %987 = vmatprep.subr.mxu0 0.0
      %988 = vmatpush2.msra.mxu0 0.0
      %989 = vmatprep.subr.mxu0 0.0
      %990 = vmatpush2.msra.mxu0 0.0
      %991 = vmatprep.subr.mxu0 0.0
      %992 = vmatpush2.msra.mxu0 0.0
      %993 = vmatprep.subr.mxu0 0.0
      %994 = vmatpush2.msra.mxu0 0.0
      %995 = vmatprep.subr.mxu0 0.0
      %996 = vmatpush2.msra.mxu0 0.0
      %997 = vmatprep.subr.mxu0 0.0
      %998 = vmatpush2.msra.mxu0 0.0
      %999 = vmatprep.subr.mxu0 0.0
      %1000 = vmatpush2.msra.mxu0 0.0
      %1001 = vmatprep.mubr.f32.mxu0 0.0
      %v1002 = vand.u32 %v682, 4294901760
      %v1003 = vsub.f32 %v682, %v1002
      %v1004 = vand.u32 %v1003, 4294901760
      %1005 = vmatmul.mubr.f32.gmra.mxu0 %v1004
      %v1006 = vpop.f32.mrf.mxu0
      %v1007 = vadd.f32 %v926, %v1006
      %v1008 = vpop.f32.mrf.mxu0
      %1009 = vmatprep.mubr.f32.mxu0 0.0
      %v1010 = vand.u32 %v685, 4294901760
      %v1011 = vsub.f32 %v685, %v1010
      %v1012 = vand.u32 %v1011, 4294901760
      %1013 = vmatmul.mubr.f32.gmra.mxu0 %v1012
      %v1014 = vpop.f32.mrf.mxu0
      %v1015 = vadd.f32 %v933, %v1014
      %v1016 = vpop.f32.mrf.mxu0
      %1017 = vdwg.mxu0
      %1018 = vmatprep.subr.mxu0 0.0
      %1019 = vmatpush1.msra.mxu0 0.0
      %1020 = vmatprep.subr.mxu0 0.0
      %1021 = vmatpush1.msra.mxu0 0.0
      %1022 = vmatprep.subr.mxu0 0.0
      %1023 = vmatpush1.msra.mxu0 0.0
      %1024 = vmatprep.subr.mxu0 0.0
      %1025 = vmatpush1.msra.mxu0 0.0
      %1026 = vmatprep.subr.mxu0 0.0
      %1027 = vmatpush1.msra.mxu0 0.0
      %1028 = vmatprep.subr.mxu0 0.0
      %1029 = vmatpush1.msra.mxu0 0.0
      %1030 = vmatprep.subr.mxu0 0.0
      %1031 = vmatpush1.msra.mxu0 0.0
      %1032 = vmatprep.subr.mxu0 0.0
      %1033 = vmatpush1.msra.mxu0 0.0
      %1034 = vmatprep.subr.mxu0 0.0
      %1035 = vmatpush1.msra.mxu0 0.0
      %1036 = vmatprep.subr.mxu0 0.0
      %1037 = vmatpush1.msra.mxu0 0.0
      %1038 = vmatprep.subr.mxu0 0.0
      %1039 = vmatpush1.msra.mxu0 0.0
      %1040 = vmatprep.subr.mxu0 0.0
      %1041 = vmatpush1.msra.mxu0 0.0
      %1042 = vmatprep.subr.mxu0 0.0
      %1043 = vmatpush1.msra.mxu0 0.0
      %1044 = vmatprep.subr.mxu0 0.0
      %1045 = vmatpush1.msra.mxu0 0.0
      %1046 = vmatprep.subr.mxu0 0.0
      %1047 = vmatpush1.msra.mxu0 0.0
      %1048 = vmatprep.subr.mxu0 0.0
      %v1049 = vand.u32 %v680, 4294901760
      %v1050 = vsub.f32 %v680, %v1049
      %v1051 = vand.u32 %v1050, 4294901760
      %1052 = vmatpush1.msra.mxu0 %v1051
      %1053 = vmatprep.subr.mxu0 0.0
      %1054 = vmatpush2.msra.mxu0 0.0
      %1055 = vmatprep.subr.mxu0 0.0
      %1056 = vmatpush2.msra.mxu0 0.0
      %1057 = vmatprep.subr.mxu0 0.0
      %1058 = vmatpush2.msra.mxu0 0.0
      %1059 = vmatprep.subr.mxu0 0.0
      %1060 = vmatpush2.msra.mxu0 0.0
      %1061 = vmatprep.subr.mxu0 0.0
      %1062 = vmatpush2.msra.mxu0 0.0
      %1063 = vmatprep.subr.mxu0 0.0
      %1064 = vmatpush2.msra.mxu0 0.0
      %1065 = vmatprep.subr.mxu0 0.0
      %1066 = vmatpush2.msra.mxu0 0.0
      %1067 = vmatprep.subr.mxu0 0.0
      %1068 = vmatpush2.msra.mxu0 0.0
      %1069 = vmatprep.subr.mxu0 0.0
      %1070 = vmatpush2.msra.mxu0 0.0
      %1071 = vmatprep.subr.mxu0 0.0
      %1072 = vmatpush2.msra.mxu0 0.0
      %1073 = vmatprep.subr.mxu0 0.0
      %1074 = vmatpush2.msra.mxu0 0.0
      %1075 = vmatprep.subr.mxu0 0.0
      %1076 = vmatpush2.msra.mxu0 0.0
      %1077 = vmatprep.subr.mxu0 0.0
      %1078 = vmatpush2.msra.mxu0 0.0
      %1079 = vmatprep.subr.mxu0 0.0
      %1080 = vmatpush2.msra.mxu0 0.0
      %1081 = vmatprep.subr.mxu0 0.0
      %1082 = vmatpush2.msra.mxu0 0.0
      %1083 = vmatprep.subr.mxu0 0.0
      %1084 = vmatpush2.msra.mxu0 0.0
      %1085 = vmatprep.mubr.f32.mxu0 0.0
      %v1086 = vand.u32 %v682, 4294901760
      %1087 = vmatmul.mubr.f32.gmra.mxu0 %v1086
      %v1088 = vpop.f32.mrf.mxu0
      %v1089 = vadd.f32 %v1007, %v1088
      %v1090 = vpop.f32.mrf.mxu0
      %1091 = vmatprep.mubr.f32.mxu0 0.0
      %v1092 = vand.u32 %v685, 4294901760
      %1093 = vmatmul.mubr.f32.gmra.mxu0 %v1092
      %v1094 = vpop.f32.mrf.mxu0
      %v1095 = vadd.f32 %v1015, %v1094
      %v1096 = vpop.f32.mrf.mxu0
      %1097 = vdwg.mxu0
      %1098 = vmatprep.subr.mxu0 0.0
      %1099 = vmatpush1.msra.mxu0 0.0
      %1100 = vmatprep.subr.mxu0 0.0
      %1101 = vmatpush1.msra.mxu0 0.0
      %1102 = vmatprep.subr.mxu0 0.0
      %1103 = vmatpush1.msra.mxu0 0.0
      %1104 = vmatprep.subr.mxu0 0.0
      %1105 = vmatpush1.msra.mxu0 0.0
      %1106 = vmatprep.subr.mxu0 0.0
      %1107 = vmatpush1.msra.mxu0 0.0
      %1108 = vmatprep.subr.mxu0 0.0
      %1109 = vmatpush1.msra.mxu0 0.0
      %1110 = vmatprep.subr.mxu0 0.0
      %1111 = vmatpush1.msra.mxu0 0.0
      %1112 = vmatprep.subr.mxu0 0.0
      %1113 = vmatpush1.msra.mxu0 0.0
      %1114 = vmatprep.subr.mxu0 0.0
      %1115 = vmatpush1.msra.mxu0 0.0
      %1116 = vmatprep.subr.mxu0 0.0
      %1117 = vmatpush1.msra.mxu0 0.0
      %1118 = vmatprep.subr.mxu0 0.0
      %1119 = vmatpush1.msra.mxu0 0.0
      %1120 = vmatprep.subr.mxu0 0.0
      %1121 = vmatpush1.msra.mxu0 0.0
      %1122 = vmatprep.subr.mxu0 0.0
      %1123 = vmatpush1.msra.mxu0 0.0
      %1124 = vmatprep.subr.mxu0 0.0
      %1125 = vmatpush1.msra.mxu0 0.0
      %1126 = vmatprep.subr.mxu0 0.0
      %1127 = vmatpush1.msra.mxu0 0.0
      %1128 = vmatprep.subr.mxu0 0.0
      %v1129 = vand.u32 %v680, 4294901760
      %1130 = vmatpush1.msra.mxu0 %v1129
      %1131 = vmatprep.subr.mxu0 0.0
      %1132 = vmatpush2.msra.mxu0 0.0
      %1133 = vmatprep.subr.mxu0 0.0
      %1134 = vmatpush2.msra.mxu0 0.0
      %1135 = vmatprep.subr.mxu0 0.0
      %1136 = vmatpush2.msra.mxu0 0.0
      %1137 = vmatprep.subr.mxu0 0.0
      %1138 = vmatpush2.msra.mxu0 0.0
      %1139 = vmatprep.subr.mxu0 0.0
      %1140 = vmatpush2.msra.mxu0 0.0
      %1141 = vmatprep.subr.mxu0 0.0
      %1142 = vmatpush2.msra.mxu0 0.0
      %1143 = vmatprep.subr.mxu0 0.0
      %1144 = vmatpush2.msra.mxu0 0.0
      %1145 = vmatprep.subr.mxu0 0.0
      %1146 = vmatpush2.msra.mxu0 0.0
      %1147 = vmatprep.subr.mxu0 0.0
      %1148 = vmatpush2.msra.mxu0 0.0
      %1149 = vmatprep.subr.mxu0 0.0
      %1150 = vmatpush2.msra.mxu0 0.0
      %1151 = vmatprep.subr.mxu0 0.0
      %1152 = vmatpush2.msra.mxu0 0.0
      %1153 = vmatprep.subr.mxu0 0.0
      %1154 = vmatpush2.msra.mxu0 0.0
      %1155 = vmatprep.subr.mxu0 0.0
      %1156 = vmatpush2.msra.mxu0 0.0
      %1157 = vmatprep.subr.mxu0 0.0
      %1158 = vmatpush2.msra.mxu0 0.0
      %1159 = vmatprep.subr.mxu0 0.0
      %1160 = vmatpush2.msra.mxu0 0.0
      %1161 = vmatprep.subr.mxu0 0.0
      %1162 = vmatpush2.msra.mxu0 0.0
      %1163 = vmatprep.mubr.f32.mxu0 0.0
      %v1164 = vand.u32 %v682, 4294901760
      %1165 = vmatmul.mubr.f32.gmra.mxu0 %v1164
      %v1166 = vpop.f32.mrf.mxu0
      %v1167 = vadd.f32 %v1089, %v1166
      %v1168 = vpop.f32.mrf.mxu0
      %1169 = vmatprep.mubr.f32.mxu0 0.0
      %v1170 = vand.u32 %v685, 4294901760
      %1171 = vmatmul.mubr.f32.gmra.mxu0 %v1170
      %v1172 = vpop.f32.mrf.mxu0
      %v1173 = vadd.f32 %v1095, %v1172
      %v1174 = vpop.f32.mrf.mxu0
      %1175 = vdwg.mxu0
      %v1176 = vadd.f32 %v675, %v1167
      %v1177 = vadd.f32 %v676, %v1173
      %v1178 = vld [vmem:[#allocation2 + $0x8] sm:$0xff]
      %v1179 = vld [vmem:[#allocation2 + $0x10] sm:$0x3]
      %s1180 = scalar_lea.vmem %s2, 16
      %v1181 = vld [vmem:[%s1180] sm:$0xff]
      %v1183 = vsel %vm169, %v1178, 0
      %v1186 = vsel %vm169, %v1179, 0
      %1188 = vmatprep.subr.mxu0 0.0
      %1189 = vmatpush1.msra.mxu0 0.0
      %1190 = vmatprep.subr.mxu0 0.0
      %1191 = vmatpush1.msra.mxu0 0.0
      %1192 = vmatprep.subr.mxu0 0.0
      %1193 = vmatpush1.msra.mxu0 0.0
      %1194 = vmatprep.subr.mxu0 0.0
      %1195 = vmatpush1.msra.mxu0 0.0
      %1196 = vmatprep.subr.mxu0 0.0
      %1197 = vmatpush1.msra.mxu0 0.0
      %1198 = vmatprep.subr.mxu0 0.0
      %1199 = vmatpush1.msra.mxu0 0.0
      %1200 = vmatprep.subr.mxu0 0.0
      %1201 = vmatpush1.msra.mxu0 0.0
      %1202 = vmatprep.subr.mxu0 0.0
      %1203 = vmatpush1.msra.mxu0 0.0
      %1204 = vmatprep.subr.mxu0 0.0
      %1205 = vmatpush1.msra.mxu0 0.0
      %1206 = vmatprep.subr.mxu0 0.0
      %1207 = vmatpush1.msra.mxu0 0.0
      %1208 = vmatprep.subr.mxu0 0.0
      %1209 = vmatpush1.msra.mxu0 0.0
      %1210 = vmatprep.subr.mxu0 0.0
      %1211 = vmatpush1.msra.mxu0 0.0
      %1212 = vmatprep.subr.mxu0 0.0
      %1213 = vmatpush1.msra.mxu0 0.0
      %1214 = vmatprep.subr.mxu0 0.0
      %1215 = vmatpush1.msra.mxu0 0.0
      %1216 = vmatprep.subr.mxu0 0.0
      %1217 = vmatpush1.msra.mxu0 0.0
      %1218 = vmatprep.subr.mxu0 0.0
      %v1219 = vand.u32 %v1181, 4294901760
      %1220 = vmatpush1.msra.mxu0 %v1219
      %1221 = vmatprep.subr.mxu0 0.0
      %1222 = vmatpush2.msra.mxu0 0.0
      %1223 = vmatprep.subr.mxu0 0.0
      %1224 = vmatpush2.msra.mxu0 0.0
      %1225 = vmatprep.subr.mxu0 0.0
      %1226 = vmatpush2.msra.mxu0 0.0
      %1227 = vmatprep.subr.mxu0 0.0
      %1228 = vmatpush2.msra.mxu0 0.0
      %1229 = vmatprep.subr.mxu0 0.0
      %1230 = vmatpush2.msra.mxu0 0.0
      %1231 = vmatprep.subr.mxu0 0.0
      %1232 = vmatpush2.msra.mxu0 0.0
      %1233 = vmatprep.subr.mxu0 0.0
      %1234 = vmatpush2.msra.mxu0 0.0
      %1235 = vmatprep.subr.mxu0 0.0
      %1236 = vmatpush2.msra.mxu0 0.0
      %1237 = vmatprep.subr.mxu0 0.0
      %1238 = vmatpush2.msra.mxu0 0.0
      %1239 = vmatprep.subr.mxu0 0.0
      %1240 = vmatpush2.msra.mxu0 0.0
      %1241 = vmatprep.subr.mxu0 0.0
      %1242 = vmatpush2.msra.mxu0 0.0
      %1243 = vmatprep.subr.mxu0 0.0
      %1244 = vmatpush2.msra.mxu0 0.0
      %1245 = vmatprep.subr.mxu0 0.0
      %1246 = vmatpush2.msra.mxu0 0.0
      %1247 = vmatprep.subr.mxu0 0.0
      %1248 = vmatpush2.msra.mxu0 0.0
      %1249 = vmatprep.subr.mxu0 0.0
      %1250 = vmatpush2.msra.mxu0 0.0
      %1251 = vmatprep.subr.mxu0 0.0
      %1252 = vmatpush2.msra.mxu0 0.0
      %1253 = vmatprep.mubr.f32.mxu0 0.0
      %v1254 = vand.u32 %v1183, 4294901760
      %v1255 = vsub.f32 %v1183, %v1254
      %v1256 = vand.u32 %v1255, 4294901760
      %v1257 = vsub.f32 %v1255, %v1256
      %v1258 = vand.u32 %v1257, 4294901760
      %1259 = vmatmul.mubr.f32.gmra.mxu0 %v1258
      %v1260 = vpop.f32.mrf.mxu0
      %v1261 = vadd.f32 0.0, %v1260
      %v1262 = vpop.f32.mrf.mxu0
      %1263 = vmatprep.mubr.f32.mxu0 0.0
      %v1264 = vand.u32 %v1186, 4294901760
      %v1265 = vsub.f32 %v1186, %v1264
      %v1266 = vand.u32 %v1265, 4294901760
      %v1267 = vsub.f32 %v1265, %v1266
      %v1268 = vand.u32 %v1267, 4294901760
      %1269 = vmatmul.mubr.f32.gmra.mxu0 %v1268
      %v1270 = vpop.f32.mrf.mxu0
      %v1271 = vadd.f32 0.0, %v1270
      %v1272 = vpop.f32.mrf.mxu0
      %1273 = vdwg.mxu0
      %1274 = vmatprep.subr.mxu0 0.0
      %1275 = vmatpush1.msra.mxu0 0.0
      %1276 = vmatprep.subr.mxu0 0.0
      %1277 = vmatpush1.msra.mxu0 0.0
      %1278 = vmatprep.subr.mxu0 0.0
      %1279 = vmatpush1.msra.mxu0 0.0
      %1280 = vmatprep.subr.mxu0 0.0
      %1281 = vmatpush1.msra.mxu0 0.0
      %1282 = vmatprep.subr.mxu0 0.0
      %1283 = vmatpush1.msra.mxu0 0.0
      %1284 = vmatprep.subr.mxu0 0.0
      %1285 = vmatpush1.msra.mxu0 0.0
      %1286 = vmatprep.subr.mxu0 0.0
      %1287 = vmatpush1.msra.mxu0 0.0
      %1288 = vmatprep.subr.mxu0 0.0
      %1289 = vmatpush1.msra.mxu0 0.0
      %1290 = vmatprep.subr.mxu0 0.0
      %1291 = vmatpush1.msra.mxu0 0.0
      %1292 = vmatprep.subr.mxu0 0.0
      %1293 = vmatpush1.msra.mxu0 0.0
      %1294 = vmatprep.subr.mxu0 0.0
      %1295 = vmatpush1.msra.mxu0 0.0
      %1296 = vmatprep.subr.mxu0 0.0
      %1297 = vmatpush1.msra.mxu0 0.0
      %1298 = vmatprep.subr.mxu0 0.0
      %1299 = vmatpush1.msra.mxu0 0.0
      %1300 = vmatprep.subr.mxu0 0.0
      %1301 = vmatpush1.msra.mxu0 0.0
      %1302 = vmatprep.subr.mxu0 0.0
      %1303 = vmatpush1.msra.mxu0 0.0
      %1304 = vmatprep.subr.mxu0 0.0
      %v1305 = vand.u32 %v1181, 4294901760
      %v1306 = vsub.f32 %v1181, %v1305
      %v1307 = vand.u32 %v1306, 4294901760
      %v1308 = vsub.f32 %v1306, %v1307
      %v1309 = vand.u32 %v1308, 4294901760
      %1310 = vmatpush1.msra.mxu0 %v1309
      %1311 = vmatprep.subr.mxu0 0.0
      %1312 = vmatpush2.msra.mxu0 0.0
      %1313 = vmatprep.subr.mxu0 0.0
      %1314 = vmatpush2.msra.mxu0 0.0
      %1315 = vmatprep.subr.mxu0 0.0
      %1316 = vmatpush2.msra.mxu0 0.0
      %1317 = vmatprep.subr.mxu0 0.0
      %1318 = vmatpush2.msra.mxu0 0.0
      %1319 = vmatprep.subr.mxu0 0.0
      %1320 = vmatpush2.msra.mxu0 0.0
      %1321 = vmatprep.subr.mxu0 0.0
      %1322 = vmatpush2.msra.mxu0 0.0
      %1323 = vmatprep.subr.mxu0 0.0
      %1324 = vmatpush2.msra.mxu0 0.0
      %1325 = vmatprep.subr.mxu0 0.0
      %1326 = vmatpush2.msra.mxu0 0.0
      %1327 = vmatprep.subr.mxu0 0.0
      %1328 = vmatpush2.msra.mxu0 0.0
      %1329 = vmatprep.subr.mxu0 0.0
      %1330 = vmatpush2.msra.mxu0 0.0
      %1331 = vmatprep.subr.mxu0 0.0
      %1332 = vmatpush2.msra.mxu0 0.0
      %1333 = vmatprep.subr.mxu0 0.0
      %1334 = vmatpush2.msra.mxu0 0.0
      %1335 = vmatprep.subr.mxu0 0.0
      %1336 = vmatpush2.msra.mxu0 0.0
      %1337 = vmatprep.subr.mxu0 0.0
      %1338 = vmatpush2.msra.mxu0 0.0
      %1339 = vmatprep.subr.mxu0 0.0
      %1340 = vmatpush2.msra.mxu0 0.0
      %1341 = vmatprep.subr.mxu0 0.0
      %1342 = vmatpush2.msra.mxu0 0.0
      %1343 = vmatprep.mubr.f32.mxu0 0.0
      %v1344 = vand.u32 %v1183, 4294901760
      %1345 = vmatmul.mubr.f32.gmra.mxu0 %v1344
      %v1346 = vpop.f32.mrf.mxu0
      %v1347 = vadd.f32 %v1261, %v1346
      %v1348 = vpop.f32.mrf.mxu0
      %1349 = vmatprep.mubr.f32.mxu0 0.0
      %v1350 = vand.u32 %v1186, 4294901760
      %1351 = vmatmul.mubr.f32.gmra.mxu0 %v1350
      %v1352 = vpop.f32.mrf.mxu0
      %v1353 = vadd.f32 %v1271, %v1352
      %v1354 = vpop.f32.mrf.mxu0
      %1355 = vdwg.mxu0
      %1356 = vmatprep.subr.mxu0 0.0
      %1357 = vmatpush1.msra.mxu0 0.0
      %1358 = vmatprep.subr.mxu0 0.0
      %1359 = vmatpush1.msra.mxu0 0.0
      %1360 = vmatprep.subr.mxu0 0.0
      %1361 = vmatpush1.msra.mxu0 0.0
      %1362 = vmatprep.subr.mxu0 0.0
      %1363 = vmatpush1.msra.mxu0 0.0
      %1364 = vmatprep.subr.mxu0 0.0
      %1365 = vmatpush1.msra.mxu0 0.0
      %1366 = vmatprep.subr.mxu0 0.0
      %1367 = vmatpush1.msra.mxu0 0.0
      %1368 = vmatprep.subr.mxu0 0.0
      %1369 = vmatpush1.msra.mxu0 0.0
      %1370 = vmatprep.subr.mxu0 0.0
      %1371 = vmatpush1.msra.mxu0 0.0
      %1372 = vmatprep.subr.mxu0 0.0
      %1373 = vmatpush1.msra.mxu0 0.0
      %1374 = vmatprep.subr.mxu0 0.0
      %1375 = vmatpush1.msra.mxu0 0.0
      %1376 = vmatprep.subr.mxu0 0.0
      %1377 = vmatpush1.msra.mxu0 0.0
      %1378 = vmatprep.subr.mxu0 0.0
      %1379 = vmatpush1.msra.mxu0 0.0
      %1380 = vmatprep.subr.mxu0 0.0
      %1381 = vmatpush1.msra.mxu0 0.0
      %1382 = vmatprep.subr.mxu0 0.0
      %1383 = vmatpush1.msra.mxu0 0.0
      %1384 = vmatprep.subr.mxu0 0.0
      %1385 = vmatpush1.msra.mxu0 0.0
      %1386 = vmatprep.subr.mxu0 0.0
      %v1387 = vand.u32 %v1181, 4294901760
      %v1388 = vsub.f32 %v1181, %v1387
      %1389 = vmatpush1.msra.mxu0 %v1388
      %1390 = vmatprep.subr.mxu0 0.0
      %1391 = vmatpush2.msra.mxu0 0.0
      %1392 = vmatprep.subr.mxu0 0.0
      %1393 = vmatpush2.msra.mxu0 0.0
      %1394 = vmatprep.subr.mxu0 0.0
      %1395 = vmatpush2.msra.mxu0 0.0
      %1396 = vmatprep.subr.mxu0 0.0
      %1397 = vmatpush2.msra.mxu0 0.0
      %1398 = vmatprep.subr.mxu0 0.0
      %1399 = vmatpush2.msra.mxu0 0.0
      %1400 = vmatprep.subr.mxu0 0.0
      %1401 = vmatpush2.msra.mxu0 0.0
      %1402 = vmatprep.subr.mxu0 0.0
      %1403 = vmatpush2.msra.mxu0 0.0
      %1404 = vmatprep.subr.mxu0 0.0
      %1405 = vmatpush2.msra.mxu0 0.0
      %1406 = vmatprep.subr.mxu0 0.0
      %1407 = vmatpush2.msra.mxu0 0.0
      %1408 = vmatprep.subr.mxu0 0.0
      %1409 = vmatpush2.msra.mxu0 0.0
      %1410 = vmatprep.subr.mxu0 0.0
      %1411 = vmatpush2.msra.mxu0 0.0
      %1412 = vmatprep.subr.mxu0 0.0
      %1413 = vmatpush2.msra.mxu0 0.0
      %1414 = vmatprep.subr.mxu0 0.0
      %1415 = vmatpush2.msra.mxu0 0.0
      %1416 = vmatprep.subr.mxu0 0.0
      %1417 = vmatpush2.msra.mxu0 0.0
      %1418 = vmatprep.subr.mxu0 0.0
      %1419 = vmatpush2.msra.mxu0 0.0
      %1420 = vmatprep.subr.mxu0 0.0
      %1421 = vmatpush2.msra.mxu0 0.0
      %1422 = vmatprep.mubr.f32.mxu0 0.0
      %v1423 = vand.u32 %v1183, 4294901760
      %v1424 = vsub.f32 %v1183, %v1423
      %1425 = vmatmul.mubr.f32.gmra.mxu0 %v1424
      %v1426 = vpop.f32.mrf.mxu0
      %v1427 = vadd.f32 %v1347, %v1426
      %v1428 = vpop.f32.mrf.mxu0
      %1429 = vmatprep.mubr.f32.mxu0 0.0
      %v1430 = vand.u32 %v1186, 4294901760
      %v1431 = vsub.f32 %v1186, %v1430
      %1432 = vmatmul.mubr.f32.gmra.mxu0 %v1431
      %v1433 = vpop.f32.mrf.mxu0
      %v1434 = vadd.f32 %v1353, %v1433
      %v1435 = vpop.f32.mrf.mxu0
      %1436 = vdwg.mxu0
      %1437 = vmatprep.subr.mxu0 0.0
      %1438 = vmatpush1.msra.mxu0 0.0
      %1439 = vmatprep.subr.mxu0 0.0
      %1440 = vmatpush1.msra.mxu0 0.0
      %1441 = vmatprep.subr.mxu0 0.0
      %1442 = vmatpush1.msra.mxu0 0.0
      %1443 = vmatprep.subr.mxu0 0.0
      %1444 = vmatpush1.msra.mxu0 0.0
      %1445 = vmatprep.subr.mxu0 0.0
      %1446 = vmatpush1.msra.mxu0 0.0
      %1447 = vmatprep.subr.mxu0 0.0
      %1448 = vmatpush1.msra.mxu0 0.0
      %1449 = vmatprep.subr.mxu0 0.0
      %1450 = vmatpush1.msra.mxu0 0.0
      %1451 = vmatprep.subr.mxu0 0.0
      %1452 = vmatpush1.msra.mxu0 0.0
      %1453 = vmatprep.subr.mxu0 0.0
      %1454 = vmatpush1.msra.mxu0 0.0
      %1455 = vmatprep.subr.mxu0 0.0
      %1456 = vmatpush1.msra.mxu0 0.0
      %1457 = vmatprep.subr.mxu0 0.0
      %1458 = vmatpush1.msra.mxu0 0.0
      %1459 = vmatprep.subr.mxu0 0.0
      %1460 = vmatpush1.msra.mxu0 0.0
      %1461 = vmatprep.subr.mxu0 0.0
      %1462 = vmatpush1.msra.mxu0 0.0
      %1463 = vmatprep.subr.mxu0 0.0
      %1464 = vmatpush1.msra.mxu0 0.0
      %1465 = vmatprep.subr.mxu0 0.0
      %1466 = vmatpush1.msra.mxu0 0.0
      %1467 = vmatprep.subr.mxu0 0.0
      %v1468 = vand.u32 %v1181, 4294901760
      %1469 = vmatpush1.msra.mxu0 %v1468
      %1470 = vmatprep.subr.mxu0 0.0
      %1471 = vmatpush2.msra.mxu0 0.0
      %1472 = vmatprep.subr.mxu0 0.0
      %1473 = vmatpush2.msra.mxu0 0.0
      %1474 = vmatprep.subr.mxu0 0.0
      %1475 = vmatpush2.msra.mxu0 0.0
      %1476 = vmatprep.subr.mxu0 0.0
      %1477 = vmatpush2.msra.mxu0 0.0
      %1478 = vmatprep.subr.mxu0 0.0
      %1479 = vmatpush2.msra.mxu0 0.0
      %1480 = vmatprep.subr.mxu0 0.0
      %1481 = vmatpush2.msra.mxu0 0.0
      %1482 = vmatprep.subr.mxu0 0.0
      %1483 = vmatpush2.msra.mxu0 0.0
      %1484 = vmatprep.subr.mxu0 0.0
      %1485 = vmatpush2.msra.mxu0 0.0
      %1486 = vmatprep.subr.mxu0 0.0
      %1487 = vmatpush2.msra.mxu0 0.0
      %1488 = vmatprep.subr.mxu0 0.0
      %1489 = vmatpush2.msra.mxu0 0.0
      %1490 = vmatprep.subr.mxu0 0.0
      %1491 = vmatpush2.msra.mxu0 0.0
      %1492 = vmatprep.subr.mxu0 0.0
      %1493 = vmatpush2.msra.mxu0 0.0
      %1494 = vmatprep.subr.mxu0 0.0
      %1495 = vmatpush2.msra.mxu0 0.0
      %1496 = vmatprep.subr.mxu0 0.0
      %1497 = vmatpush2.msra.mxu0 0.0
      %1498 = vmatprep.subr.mxu0 0.0
      %1499 = vmatpush2.msra.mxu0 0.0
      %1500 = vmatprep.subr.mxu0 0.0
      %1501 = vmatpush2.msra.mxu0 0.0
      %1502 = vmatprep.mubr.f32.mxu0 0.0
      %v1503 = vand.u32 %v1183, 4294901760
      %v1504 = vsub.f32 %v1183, %v1503
      %v1505 = vand.u32 %v1504, 4294901760
      %1506 = vmatmul.mubr.f32.gmra.mxu0 %v1505
      %v1507 = vpop.f32.mrf.mxu0
      %v1508 = vadd.f32 %v1427, %v1507
      %v1509 = vpop.f32.mrf.mxu0
      %1510 = vmatprep.mubr.f32.mxu0 0.0
      %v1511 = vand.u32 %v1186, 4294901760
      %v1512 = vsub.f32 %v1186, %v1511
      %v1513 = vand.u32 %v1512, 4294901760
      %1514 = vmatmul.mubr.f32.gmra.mxu0 %v1513
      %v1515 = vpop.f32.mrf.mxu0
      %v1516 = vadd.f32 %v1434, %v1515
      %v1517 = vpop.f32.mrf.mxu0
      %1518 = vdwg.mxu0
      %1519 = vmatprep.subr.mxu0 0.0
      %1520 = vmatpush1.msra.mxu0 0.0
      %1521 = vmatprep.subr.mxu0 0.0
      %1522 = vmatpush1.msra.mxu0 0.0
      %1523 = vmatprep.subr.mxu0 0.0
      %1524 = vmatpush1.msra.mxu0 0.0
      %1525 = vmatprep.subr.mxu0 0.0
      %1526 = vmatpush1.msra.mxu0 0.0
      %1527 = vmatprep.subr.mxu0 0.0
      %1528 = vmatpush1.msra.mxu0 0.0
      %1529 = vmatprep.subr.mxu0 0.0
      %1530 = vmatpush1.msra.mxu0 0.0
      %1531 = vmatprep.subr.mxu0 0.0
      %1532 = vmatpush1.msra.mxu0 0.0
      %1533 = vmatprep.subr.mxu0 0.0
      %1534 = vmatpush1.msra.mxu0 0.0
      %1535 = vmatprep.subr.mxu0 0.0
      %1536 = vmatpush1.msra.mxu0 0.0
      %1537 = vmatprep.subr.mxu0 0.0
      %1538 = vmatpush1.msra.mxu0 0.0
      %1539 = vmatprep.subr.mxu0 0.0
      %1540 = vmatpush1.msra.mxu0 0.0
      %1541 = vmatprep.subr.mxu0 0.0
      %1542 = vmatpush1.msra.mxu0 0.0
      %1543 = vmatprep.subr.mxu0 0.0
      %1544 = vmatpush1.msra.mxu0 0.0
      %1545 = vmatprep.subr.mxu0 0.0
      %1546 = vmatpush1.msra.mxu0 0.0
      %1547 = vmatprep.subr.mxu0 0.0
      %1548 = vmatpush1.msra.mxu0 0.0
      %1549 = vmatprep.subr.mxu0 0.0
      %v1550 = vand.u32 %v1181, 4294901760
      %v1551 = vsub.f32 %v1181, %v1550
      %v1552 = vand.u32 %v1551, 4294901760
      %1553 = vmatpush1.msra.mxu0 %v1552
      %1554 = vmatprep.subr.mxu0 0.0
      %1555 = vmatpush2.msra.mxu0 0.0
      %1556 = vmatprep.subr.mxu0 0.0
      %1557 = vmatpush2.msra.mxu0 0.0
      %1558 = vmatprep.subr.mxu0 0.0
      %1559 = vmatpush2.msra.mxu0 0.0
      %1560 = vmatprep.subr.mxu0 0.0
      %1561 = vmatpush2.msra.mxu0 0.0
      %1562 = vmatprep.subr.mxu0 0.0
      %1563 = vmatpush2.msra.mxu0 0.0
      %1564 = vmatprep.subr.mxu0 0.0
      %1565 = vmatpush2.msra.mxu0 0.0
      %1566 = vmatprep.subr.mxu0 0.0
      %1567 = vmatpush2.msra.mxu0 0.0
      %1568 = vmatprep.subr.mxu0 0.0
      %1569 = vmatpush2.msra.mxu0 0.0
      %1570 = vmatprep.subr.mxu0 0.0
      %1571 = vmatpush2.msra.mxu0 0.0
      %1572 = vmatprep.subr.mxu0 0.0
      %1573 = vmatpush2.msra.mxu0 0.0
      %1574 = vmatprep.subr.mxu0 0.0
      %1575 = vmatpush2.msra.mxu0 0.0
      %1576 = vmatprep.subr.mxu0 0.0
      %1577 = vmatpush2.msra.mxu0 0.0
      %1578 = vmatprep.subr.mxu0 0.0
      %1579 = vmatpush2.msra.mxu0 0.0
      %1580 = vmatprep.subr.mxu0 0.0
      %1581 = vmatpush2.msra.mxu0 0.0
      %1582 = vmatprep.subr.mxu0 0.0
      %1583 = vmatpush2.msra.mxu0 0.0
      %1584 = vmatprep.subr.mxu0 0.0
      %1585 = vmatpush2.msra.mxu0 0.0
      %1586 = vmatprep.mubr.f32.mxu0 0.0
      %v1587 = vand.u32 %v1183, 4294901760
      %1588 = vmatmul.mubr.f32.gmra.mxu0 %v1587
      %v1589 = vpop.f32.mrf.mxu0
      %v1590 = vadd.f32 %v1508, %v1589
      %v1591 = vpop.f32.mrf.mxu0
      %1592 = vmatprep.mubr.f32.mxu0 0.0
      %v1593 = vand.u32 %v1186, 4294901760
      %1594 = vmatmul.mubr.f32.gmra.mxu0 %v1593
      %v1595 = vpop.f32.mrf.mxu0
      %v1596 = vadd.f32 %v1516, %v1595
      %v1597 = vpop.f32.mrf.mxu0
      %1598 = vdwg.mxu0
      %1599 = vmatprep.subr.mxu0 0.0
      %1600 = vmatpush1.msra.mxu0 0.0
      %1601 = vmatprep.subr.mxu0 0.0
      %1602 = vmatpush1.msra.mxu0 0.0
      %1603 = vmatprep.subr.mxu0 0.0
      %1604 = vmatpush1.msra.mxu0 0.0
      %1605 = vmatprep.subr.mxu0 0.0
      %1606 = vmatpush1.msra.mxu0 0.0
      %1607 = vmatprep.subr.mxu0 0.0
      %1608 = vmatpush1.msra.mxu0 0.0
      %1609 = vmatprep.subr.mxu0 0.0
      %1610 = vmatpush1.msra.mxu0 0.0
      %1611 = vmatprep.subr.mxu0 0.0
      %1612 = vmatpush1.msra.mxu0 0.0
      %1613 = vmatprep.subr.mxu0 0.0
      %1614 = vmatpush1.msra.mxu0 0.0
      %1615 = vmatprep.subr.mxu0 0.0
      %1616 = vmatpush1.msra.mxu0 0.0
      %1617 = vmatprep.subr.mxu0 0.0
      %1618 = vmatpush1.msra.mxu0 0.0
      %1619 = vmatprep.subr.mxu0 0.0
      %1620 = vmatpush1.msra.mxu0 0.0
      %1621 = vmatprep.subr.mxu0 0.0
      %1622 = vmatpush1.msra.mxu0 0.0
      %1623 = vmatprep.subr.mxu0 0.0
      %1624 = vmatpush1.msra.mxu0 0.0
      %1625 = vmatprep.subr.mxu0 0.0
      %1626 = vmatpush1.msra.mxu0 0.0
      %1627 = vmatprep.subr.mxu0 0.0
      %1628 = vmatpush1.msra.mxu0 0.0
      %1629 = vmatprep.subr.mxu0 0.0
      %v1630 = vand.u32 %v1181, 4294901760
      %1631 = vmatpush1.msra.mxu0 %v1630
      %1632 = vmatprep.subr.mxu0 0.0
      %1633 = vmatpush2.msra.mxu0 0.0
      %1634 = vmatprep.subr.mxu0 0.0
      %1635 = vmatpush2.msra.mxu0 0.0
      %1636 = vmatprep.subr.mxu0 0.0
      %1637 = vmatpush2.msra.mxu0 0.0
      %1638 = vmatprep.subr.mxu0 0.0
      %1639 = vmatpush2.msra.mxu0 0.0
      %1640 = vmatprep.subr.mxu0 0.0
      %1641 = vmatpush2.msra.mxu0 0.0
      %1642 = vmatprep.subr.mxu0 0.0
      %1643 = vmatpush2.msra.mxu0 0.0
      %1644 = vmatprep.subr.mxu0 0.0
      %1645 = vmatpush2.msra.mxu0 0.0
      %1646 = vmatprep.subr.mxu0 0.0
      %1647 = vmatpush2.msra.mxu0 0.0
      %1648 = vmatprep.subr.mxu0 0.0
      %1649 = vmatpush2.msra.mxu0 0.0
      %1650 = vmatprep.subr.mxu0 0.0
      %1651 = vmatpush2.msra.mxu0 0.0
      %1652 = vmatprep.subr.mxu0 0.0
      %1653 = vmatpush2.msra.mxu0 0.0
      %1654 = vmatprep.subr.mxu0 0.0
      %1655 = vmatpush2.msra.mxu0 0.0
      %1656 = vmatprep.subr.mxu0 0.0
      %1657 = vmatpush2.msra.mxu0 0.0
      %1658 = vmatprep.subr.mxu0 0.0
      %1659 = vmatpush2.msra.mxu0 0.0
      %1660 = vmatprep.subr.mxu0 0.0
      %1661 = vmatpush2.msra.mxu0 0.0
      %1662 = vmatprep.subr.mxu0 0.0
      %1663 = vmatpush2.msra.mxu0 0.0
      %1664 = vmatprep.mubr.f32.mxu0 0.0
      %v1665 = vand.u32 %v1183, 4294901760
      %1666 = vmatmul.mubr.f32.gmra.mxu0 %v1665
      %v1667 = vpop.f32.mrf.mxu0
      %v1668 = vadd.f32 %v1590, %v1667
      %v1669 = vpop.f32.mrf.mxu0
      %1670 = vmatprep.mubr.f32.mxu0 0.0
      %v1671 = vand.u32 %v1186, 4294901760
      %1672 = vmatmul.mubr.f32.gmra.mxu0 %v1671
      %v1673 = vpop.f32.mrf.mxu0
      %v1674 = vadd.f32 %v1596, %v1673
      %v1675 = vpop.f32.mrf.mxu0
      %1676 = vdwg.mxu0
      %v1677 = vadd.f32 %v1176, %v1668
      %v1678 = vadd.f32 %v1177, %v1674
      %vm1679 = vcmask 80896
      %1680 = vst.msk [vmem:[%s168] sm:$0xff] %vm1679, %v1677
      %vm1681 = vcmask 74752
      %1682 = vst.msk [vmem:[%s168 + $0x8] sm:$0x3] %vm1681, %v1678
      %p1683 = scmp.lt.s32.totalorder %s15, 4
      %s1684 = scalar_select %p1683, %s15, 4
      %s1685 = smul.addr %s1684, 2
      %s1686 = smul.addr %s1685, 8
      %s1687 = scalar_lea.vmem %s3, %s1686
      // Predicated region
      $region33: #{splatter_forward.1} parent=31 // pred_check
        %p1688 = pneg %p101
      $region34: #{splatter_forward.1} parent=31 // pred_check_branch
        %1690 = sbr.rel (%p1688) target = $region36
      $region35: #{splatter_forward.1} parent=31 // pred_region
        _
      $region36: #{splatter_forward.1} parent=31 // pred_fallthru
        _
    $region32: #{splatter_forward.1} parent=5 // pred_fallthru
      _
    %p1691 = scmp.le.s32.totalorder 2, %s10
    // Predicated region
    $region37: #{splatter_forward.1} parent=5 // pred_check
      %p1692 = pneg %p1691
    $region38: #{splatter_forward.1} parent=5 // pred_check_branch
      %1694 = sbr.rel (%p1692) target = $region40
    $region39: #{splatter_forward.1} parent=5 // pred_region
      %s1695 = ssub.s32 %s10, 2
      // Predicated region
      $region41: #{splatter_forward.1} parent=39 // pred_check
        %p1696 = pneg %p107
      $region42: #{splatter_forward.1} parent=39 // pred_check_branch
        %1698 = sbr.rel (%p1696) target = $region44
      $region43: #{splatter_forward.1} parent=39 // pred_region
        %p1699 = scmp.lt.s32.totalorder %s16, 4
        %s1700 = scalar_select %p1699, %s16, 4
        %s1701 = smul.addr %s1700, 2
        %s1702 = smul.addr %s1701, 8
        %s1703 = scalar_lea.vmem %s3, %s1702
      $region44: #{splatter_forward.1} parent=39 // pred_fallthru
        _
    $region40: #{splatter_forward.1} parent=5 // pred_fallthru
      _
  $region6: #{splatter_forward.1} parent=0 // loop_footer
    %s14 = sadd.s32 1, %s10
  $region7: #{splatter_forward.1} parent=0 // loop_footer_branch
    %9 = sbr.rel target = $region3
  $region8: #{splatter_forward.1} parent=0 // loop_exit
    _

</llo_original>
